<compile_context>
chip_gen: v6e
topology: v6e:2x2x1
jax: 0.10.0
libtpu: 0.0.40
codegen_flags: <defaults>
</compile_context>

<pallas_src>
import functools
import math

import jax
import jax.numpy as jnp
from jax.experimental import pallas as pl
from jax.experimental.pallas import tpu as pltpu

EPS = 1e-5
VMEM_LIMIT = 48 * 1024 * 1024  # safe on v5e/v6e (128 MiB) and v7x (64 MiB)


# ----------------------------------------------------------------------------
# helpers (mirror the PyTorch module construction)
# ----------------------------------------------------------------------------
def _make_divisible(v, divisor, min_value=None):
    if min_value is None:
        min_value = divisor
    new_v = max(min_value, int(v + divisor / 2) // divisor * divisor)
    if new_v < 0.9 * v:
        return new_v + divisor
    return new_v


class _KeyGen:
    def __init__(self, key):
        self.key = key

    def __call__(self):
        self.key, sub = jax.random.split(self.key)
        return sub


def _conv_w(key, shape, fan_n):
    # PyTorch init: normal(0, sqrt(2 / (k*k*out_channels)))
    std = math.sqrt(2.0 / fan_n)
    return std * jax.random.normal(key, shape, jnp.float32)


def _bn_fold(c):
    gamma = jnp.ones((c,), jnp.float32)
    beta = jnp.zeros((c,), jnp.float32)
    mean = jnp.zeros((c,), jnp.float32)
    var = jnp.ones((c,), jnp.float32)
    scale = gamma / jnp.sqrt(var + EPS)
    bias = beta - mean * scale
    return scale, bias


def _round_up(v, m):
    return ((v + m - 1) // m) * m


def _unflatten(yflat, H, W, C):
    """(N, (H-1)*(W+2)+W, C) flat conv output -> (N, H, W, C)."""
    N = yflat.shape[0]
    Wp = W + 2
    y = jnp.pad(yflat, ((0, 0), (0, H * Wp - yflat.shape[1]), (0, 0)))
    return y.reshape(N, H, Wp, C)[:, :, :W, :]


# ----------------------------------------------------------------------------
# Pallas kernels
# ----------------------------------------------------------------------------
def _pw_kernel(x_ref, w_ref, b_ref, o_ref, *, relu_in, relu_out):
    """Tiled 1x1-conv matmul (BN scale pre-folded into w) + bias + ReLU."""
    x = x_ref[...]
    if relu_in:
        x = jnp.maximum(x, 0.0)
    y = jnp.dot(x.astype(jnp.bfloat16), w_ref[...],
                preferred_element_type=jnp.float32)
    y = y + b_ref[...]
    if relu_out:
        y = jnp.maximum(y, 0.0)
    o_ref[...] = y


def _stem_kernel(x_ref, w_ref, b_ref, o_ref, *, H, W):
    """3x3 conv (stride 1, pad 1) + folded BN + ReLU on a flattened padded
    per-sample block: 9 shifted contiguous slices, each a K=3 matmul."""
    Wp = W + 2
    L = (H - 1) * Wp + W
    x = x_ref[0].astype(jnp.bfloat16)                 # ((H+2)*(W+2), 3)
    Cout = w_ref.shape[-1]
    acc = jnp.zeros((L, Cout), jnp.float32)
    for di in range(3):
        for dj in range(3):
            off = di * Wp + dj
            acc = acc + jnp.dot(x[off:off + L, :], w_ref[di * 3 + dj],
                                preferred_element_type=jnp.float32)
    o_ref[0] = jnp.maximum(acc + b_ref[...], 0.0)


def _block_s1_kernel(*refs, H, W, expand, use_res):
    """Fused stride-1 inverted residual:
       (1x1 expand + BN + ReLU)? -> dw3x3 + BN + ReLU -> 1x1 project + BN
       (+ residual).  Hidden activation never leaves VMEM."""
    if expand:
        (x_ref, m_ref, we_ref, be_ref, wd_ref, bd_ref, wp_ref, bp_ref,
         o_ref) = refs
    else:
        x_ref, m_ref, wd_ref, bd_ref, wp_ref, bp_ref, o_ref = refs
    Wp = W + 2
    L = (H - 1) * Wp + W
    x = x_ref[0]                                      # ((H+2)*(W+2), Cin) f32
    if expand:
        h = jnp.dot(x.astype(jnp.bfloat16), we_ref[...],
                    preferred_element_type=jnp.float32) + be_ref[...]
        h = jnp.maximum(h, 0.0)
    else:
        h = x
    # zero the hidden rows that sit on the spatial zero-padding halo
    h = h * m_ref[...]
    # depthwise 3x3, stride 1: 9 shifted contiguous slices of the flat hidden
    wd = wd_ref[...]                                  # (9, Hid), scale folded
    acc = jnp.zeros((L, h.shape[1]), jnp.float32)
    for di in range(3):
        for dj in range(3):
            off = di * Wp + dj
            acc = acc + h[off:off + L, :] * wd[di * 3 + dj:di * 3 + dj + 1, :]
    acc = jnp.maximum(acc + bd_ref[...], 0.0)
    # 1x1 project + BN bias (+ residual)
    y = jnp.dot(acc.astype(jnp.bfloat16), wp_ref[...],
                preferred_element_type=jnp.float32) + bp_ref[...]
    if use_res:
        y = y + x[Wp + 1:Wp + 1 + L, :]
    o_ref[0] = y


def _dw_s2_kernel(p00_ref, p01_ref, p10_ref, p11_ref, w_ref, b_ref, o_ref,
                  *, Ho, Wo):
    """Stride-2 depthwise 3x3 + folded BN + ReLU computed directly on the
    even output grid via the 4-phase decomposition (no 4x over-compute)."""
    ph = ((p00_ref[0], p01_ref[0]), (p10_ref[0], p11_ref[0]))
    w = w_ref[...]                                    # (9, C)
    C = w.shape[1]
    acc = jnp.zeros((Ho, Wo, C), jnp.float32)
    for di in range(3):
        for dj in range(3):
            src = ph[di % 2][dj % 2]
            si, sj = di // 2, dj // 2
            patch = src[si:si + Ho, sj:sj + Wo, :]
            acc = acc + patch * w[di * 3 + dj:di * 3 + dj + 1, :]
    b = b_ref[...].reshape(1, 1, C)
    o_ref[0] = jnp.maximum(acc + b, 0.0)


def _head_kernel(x_ref, w_ref, b_ref, o_ref):
    """AdaptiveAvgPool2d(1) + flatten + Linear."""
    xm = jnp.mean(x_ref[...], axis=(1, 2))            # (N, C)
    o_ref[...] = jnp.dot(xm.astype(jnp.bfloat16), w_ref[...],
                         preferred_element_type=jnp.float32) + b_ref[...]


# ----------------------------------------------------------------------------
# kernel wrappers
# ----------------------------------------------------------------------------
def pointwise(x2d, w_bf16, bias, *, relu_in=False, relu_out=False, tm=256):
    """Tiled 1x1 conv over the flattened M=N*H*W axis."""
    M, K = x2d.shape
    Cout = w_bf16.shape[1]
    TM = min(tm, _round_up(M, 8))
    Mp = _round_up(M, TM)
    if Mp != M:
        x2d = jnp.pad(x2d, ((0, Mp - M), (0, 0)))
    out = pl.pallas_call(
        functools.partial(_pw_kernel, relu_in=relu_in, relu_out=relu_out),
        grid=(Mp // TM,),
        in_specs=[pl.BlockSpec((TM, K), lambda i: (i, 0)),
                  pl.BlockSpec((K, Cout), lambda i: (0, 0)),
                  pl.BlockSpec((1, Cout), lambda i: (0, 0))],
        out_specs=pl.BlockSpec((TM, Cout), lambda i: (i, 0)),
        out_shape=jax.ShapeDtypeStruct((Mp, Cout), jnp.float32),
        compiler_params=pltpu.CompilerParams(
            dimension_semantics=("parallel",),
            vmem_limit_bytes=VMEM_LIMIT),
    )(x2d, w_bf16, bias)
    return out[:M] if Mp != M else out


def stem(x, w, b):
    """First 3x3 conv + BN + ReLU (stride 1, pad 1)."""
    N, H, W, _ = x.shape
    Hp, Wp = H + 2, W + 2
    L = (H - 1) * Wp + W
    C0 = w.shape[-1]
    xf = jnp.pad(x, ((0, 0), (1, 1), (1, 1), (0, 0))).reshape(N, Hp * Wp, 3)
    yflat = pl.pallas_call(
        functools.partial(_stem_kernel, H=H, W=W),
        grid=(N,),
        in_specs=[pl.BlockSpec((1, Hp * Wp, 3), lambda n: (n, 0, 0)),
                  pl.BlockSpec((9, 3, C0), lambda n: (0, 0, 0)),
                  pl.BlockSpec((1, C0), lambda n: (0, 0))],
        out_specs=pl.BlockSpec((1, L, C0), lambda n: (n, 0, 0)),
        out_shape=jax.ShapeDtypeStruct((N, L, C0), jnp.float32),
        compiler_params=pltpu.CompilerParams(
            dimension_semantics=("parallel",),
            vmem_limit_bytes=VMEM_LIMIT),
    )(xf, w, b)
    return _unflatten(yflat, H, W, C0)


def fused_block_s1(x, blk):
    """One pallas_call per stride-1 inverted-residual block."""
    N, H, W, Cin = x.shape
    Hp, Wp = H + 2, W + 2
    L = (H - 1) * Wp + W
    Cout = blk["proj_w"].shape[1]
    xf = jnp.pad(x, ((0, 0), (1, 1), (1, 1), (0, 0))).reshape(N, Hp * Wp, Cin)
    # interior mask: 1 inside the image, 0 on the zero-padding halo
    mask = jnp.pad(jnp.ones((H, W), jnp.float32),
                   ((1, 1), (1, 1))).reshape(Hp * Wp, 1)
    expand = "exp_w" in blk
    args = [xf, mask]
    in_specs = [pl.BlockSpec((1, Hp * Wp, Cin), lambda n: (n, 0, 0)),
                pl.BlockSpec((Hp * Wp, 1), lambda n: (0, 0))]
    consts = ([blk["exp_w"], blk["exp_b"]] if expand else []) + \
             [blk["dw_w"], blk["dw_b"], blk["proj_w"], blk["proj_b"]]
    for cst in consts:
        args.append(cst)
        in_specs.append(pl.BlockSpec(cst.shape, lambda n: (0, 0)))
    yflat = pl.pallas_call(
        functools.partial(_block_s1_kernel, H=H, W=W, expand=expand,
                          use_res=blk["use_res"]),
        grid=(N,),
        in_specs=in_specs,
        out_specs=pl.BlockSpec((1, L, Cout), lambda n: (n, 0, 0)),
        out_shape=jax.ShapeDtypeStruct((N, L, Cout), jnp.float32),
        compiler_params=pltpu.CompilerParams(
            dimension_semantics=("parallel",),
            vmem_limit_bytes=VMEM_LIMIT),
    )(*args)
    return _unflatten(yflat, H, W, Cout)


def depthwise_s2(h, w9, bias):
    """Direct stride-2 depthwise 3x3 + BN + ReLU via 4-phase inputs."""
    N, H, W, C = h.shape
    Ho, Wo = H // 2, W // 2
    hp = jnp.pad(h, ((0, 0), (1, 1), (1, 1), (0, 0)))
    phases = [hp[:, a::2, b::2, :] for a in (0, 1) for b in (0, 1)]
    Hq, Wq = H // 2 + 1, W // 2 + 1
    return pl.pallas_call(
        functools.partial(_dw_s2_kernel, Ho=Ho, Wo=Wo),
        grid=(N,),
        in_specs=[pl.BlockSpec((1, Hq, Wq, C), lambda n: (n, 0, 0, 0))] * 4
                 + [pl.BlockSpec((9, C), lambda n: (0, 0)),
                    pl.BlockSpec((1, C), lambda n: (0, 0))],
        out_specs=pl.BlockSpec((1, Ho, Wo, C), lambda n: (n, 0, 0, 0)),
        out_shape=jax.ShapeDtypeStruct((N, Ho, Wo, C), jnp.float32),
        compiler_params=pltpu.CompilerParams(
            dimension_semantics=("parallel",),
            vmem_limit_bytes=VMEM_LIMIT),
    )(*phases, w9, bias)


def block_s2(x, blk):
    """Unfused stride-2 inverted residual: expand -> dw(stride2) -> project."""
    N, H, W, Cin = x.shape
    h = x
    if "exp_w" in blk:
        y = pointwise(h.reshape(N * H * W, Cin), blk["exp_w"], blk["exp_b"],
                      relu_out=True)
        h = y.reshape(N, H, W, -1)
    h = depthwise_s2(h, blk["dw_w"], blk["dw_b"])
    Nh, Ho, Wo, Ch = h.shape
    y = pointwise(h.reshape(Nh * Ho * Wo, Ch), blk["proj_w"], blk["proj_b"],
                  relu_out=False)
    return y.reshape(Nh, Ho, Wo, -1)


def head(x_nhwc, fc_w, fc_b):
    N = x_nhwc.shape[0]
    return pl.pallas_call(
        _head_kernel,
        out_shape=jax.ShapeDtypeStruct((N, fc_w.shape[1]), jnp.float32),
        compiler_params=pltpu.CompilerParams(vmem_limit_bytes=VMEM_LIMIT),
    )(x_nhwc, fc_w, fc_b)


# ----------------------------------------------------------------------------
# model
# ----------------------------------------------------------------------------
def init_params(key, num_classes=100, width_mult=1.0, round_nearest=8):
    kg = _KeyGen(key)
    cfg = [[1, 16, 1, 1], [6, 24, 2, 1], [6, 32, 3, 2], [6, 64, 4, 2],
           [6, 96, 3, 1], [6, 160, 3, 2], [6, 320, 1, 1]]
    input_channel = _make_divisible(32 * width_mult, round_nearest)
    last_channel = _make_divisible(1280 * max(1.0, width_mult), round_nearest)

    params = {}
    w = _conv_w(kg(), (3, 3, 3, input_channel), 9 * input_channel)
    sc, bi = _bn_fold(input_channel)
    params["stem_w"] = (w * sc).reshape(9, 3, input_channel).astype(jnp.bfloat16)
    params["stem_b"] = bi.reshape(1, input_channel)

    blocks = []
    for t, c, n, s in cfg:
        output_channel = _make_divisible(c * width_mult, round_nearest)
        for i in range(n):
            stride = s if i == 0 else 1
            hidden = int(input_channel * t)
            blk = {"stride": stride,
                   "use_res": stride == 1 and input_channel == output_channel}
            if t != 1:
                w = _conv_w(kg(), (input_channel, hidden), hidden)
                sc, bi = _bn_fold(hidden)
                blk["exp_w"] = (w * sc).astype(jnp.bfloat16)
                blk["exp_b"] = bi.reshape(1, hidden)
            w = _conv_w(kg(), (3, 3, hidden), 9 * hidden)
            sc, bi = _bn_fold(hidden)
            blk["dw_w"] = (w * sc).reshape(9, hidden)            # f32, VPU path
            blk["dw_b"] = bi.reshape(1, hidden)
            w = _conv_w(kg(), (hidden, output_channel), output_channel)
            sc, bi = _bn_fold(output_channel)
            blk["proj_w"] = (w * sc).astype(jnp.bfloat16)
            blk["proj_b"] = bi.reshape(1, output_channel)
            blocks.append(blk)
            input_channel = output_channel
    params["blocks"] = blocks

    w = _conv_w(kg(), (input_channel, last_channel), last_channel)
    sc, bi = _bn_fold(last_channel)
    params["last_w"] = (w * sc).astype(jnp.bfloat16)
    params["last_b"] = bi.reshape(1, last_channel)
    params["fc_w"] = (0.01 * jax.random.normal(
        kg(), (last_channel, num_classes), jnp.float32)).astype(jnp.bfloat16)
    params["fc_b"] = jnp.zeros((1, num_classes), jnp.float32)
    return params


def forward(params, x_nchw):
    # NCHW -> NHWC (channels on lanes)
    x = jnp.transpose(x_nchw, (0, 2, 3, 1)).astype(jnp.float32)

    # first_layer: 3x3 conv + BN + ReLU
    x = stem(x, params["stem_w"], params["stem_b"])

    # layer1..layer4: inverted residual blocks
    for blk in params["blocks"]:
        if blk["stride"] == 1:
            x = fused_block_s1(x, blk)
        else:
            x = block_s2(x, blk)

    # x = torch.relu(x); x = last_layer(x)   (relu folded as relu_in)
    N, H, W, C = x.shape
    y = pointwise(x.reshape(N * H * W, C), params["last_w"], params["last_b"],
                  relu_in=True, relu_out=True)
    x = y.reshape(N, H, W, -1)
    emb4 = jnp.transpose(x, (0, 3, 1, 2))          # NCHW, matches PyTorch emb4

    # avg_pool + flatten + fc
    out = head(x, params["fc_w"], params["fc_b"])
    return emb4, out


if __name__ == "__main__":
    key = jax.random.PRNGKey(0)
    pkey, xkey = jax.random.split(key)
    params = init_params(pkey, num_classes=100)
    x = jax.random.normal(xkey, (2, 3, 16, 16), jnp.float32)   # small NCHW input
    emb4, out = forward(params, x)
    jax.block_until_ready((emb4, out))
    assert emb4.shape == (2, 1280, 2, 2), emb4.shape
    assert out.shape == (2, 100), out.shape
    assert bool(jnp.all(jnp.isfinite(emb4))) and bool(jnp.all(jnp.isfinite(out)))
    print("KERNEL_OK")
</pallas_src>

<mosaic_0001>
module attributes {stable_mosaic.version = 11 : i64} {
  func.func @_stem_kernel(%arg0: i32, %arg1: memref<1x324x3xf32, #tpu.memory_space<vmem>>, %arg2: memref<9x3x32xbf16, #tpu.memory_space<vmem>>, %arg3: memref<1x32xf32, #tpu.memory_space<vmem>>, %arg4: memref<1x286x32xf32, #tpu.memory_space<vmem>>) attributes {dimension_semantics = [#tpu.dimension_semantics<parallel>], iteration_bounds = array<i64: 2>, scalar_prefetch = 0 : i64, scratch_operands = 0 : i64, tpu.core_type = #tpu.core_type<tc>, window_params = [{transform_indices = @transform_0, window_bounds = array<i64: 1, 324, 3>}, {pipeline_mode = #tpu.pipeline_mode<synchronous>, transform_indices = @transform_1, window_bounds = array<i64: 9, 3, 32>}, {pipeline_mode = #tpu.pipeline_mode<synchronous>, transform_indices = @transform_2, window_bounds = array<i64: 1, 32>}, {transform_indices = @transform_3, window_bounds = array<i64: 1, 286, 32>}]} {
    %c0 = arith.constant 0 : index
    %c0_0 = arith.constant 0 : index
    %c0_1 = arith.constant 0 : index
    %0 = vector.load %arg1[%c0, %c0_0, %c0_1] : memref<1x324x3xf32, #tpu.memory_space<vmem>>, vector<1x324x3xf32>
    %1 = vector.shape_cast %0 : vector<1x324x3xf32> to vector<324x3xf32>
    %2 = arith.truncf %1 : vector<324x3xf32> to vector<324x3xbf16>
    %cst = arith.constant 0.000000e+00 : f32
    %3 = vector.broadcast %cst : f32 to vector<286x32xf32>
    %4 = vector.extract_strided_slice %2 {offsets = [0, 0], sizes = [286, 3], strides = [1, 1]} : vector<324x3xbf16> to vector<286x3xbf16>
    %c0_2 = arith.constant 0 : index
    %c0_3 = arith.constant 0 : index
    %c0_4 = arith.constant 0 : index
    %5 = vector.load %arg2[%c0_2, %c0_3, %c0_4] : memref<9x3x32xbf16, #tpu.memory_space<vmem>>, vector<1x3x32xbf16>
    %6 = vector.shape_cast %5 : vector<1x3x32xbf16> to vector<3x32xbf16>
    %cst_5 = arith.constant dense<0.000000e+00> : vector<286x32xf32>
    %7 = tpu.matmul %4, %6, %cst_5 {dimension_numbers = #tpu.dot_dimension_numbers<[1], [0], [0], [1], [0, 0, 1, 1], [], []>} : vector<286x3xbf16>, vector<3x32xbf16>, vector<286x32xf32> -> vector<286x32xf32>
    %8 = arith.addf %3, %7 : vector<286x32xf32>
    %9 = vector.extract_strided_slice %2 {offsets = [1, 0], sizes = [286, 3], strides = [1, 1]} : vector<324x3xbf16> to vector<286x3xbf16>
    %c1 = arith.constant 1 : index
    %c0_6 = arith.constant 0 : index
    %c0_7 = arith.constant 0 : index
    %10 = vector.load %arg2[%c1, %c0_6, %c0_7] : memref<9x3x32xbf16, #tpu.memory_space<vmem>>, vector<1x3x32xbf16>
    %11 = vector.shape_cast %10 : vector<1x3x32xbf16> to vector<3x32xbf16>
    %cst_8 = arith.constant dense<0.000000e+00> : vector<286x32xf32>
    %12 = tpu.matmul %9, %11, %cst_8 {dimension_numbers = #tpu.dot_dimension_numbers<[1], [0], [0], [1], [0, 0, 1, 1], [], []>} : vector<286x3xbf16>, vector<3x32xbf16>, vector<286x32xf32> -> vector<286x32xf32>
    %13 = arith.addf %8, %12 : vector<286x32xf32>
    %14 = vector.extract_strided_slice %2 {offsets = [2, 0], sizes = [286, 3], strides = [1, 1]} : vector<324x3xbf16> to vector<286x3xbf16>
    %c2 = arith.constant 2 : index
    %c0_9 = arith.constant 0 : index
    %c0_10 = arith.constant 0 : index
    %15 = vector.load %arg2[%c2, %c0_9, %c0_10] : memref<9x3x32xbf16, #tpu.memory_space<vmem>>, vector<1x3x32xbf16>
    %16 = vector.shape_cast %15 : vector<1x3x32xbf16> to vector<3x32xbf16>
    %cst_11 = arith.constant dense<0.000000e+00> : vector<286x32xf32>
    %17 = tpu.matmul %14, %16, %cst_11 {dimension_numbers = #tpu.dot_dimension_numbers<[1], [0], [0], [1], [0, 0, 1, 1], [], []>} : vector<286x3xbf16>, vector<3x32xbf16>, vector<286x32xf32> -> vector<286x32xf32>
    %18 = arith.addf %13, %17 : vector<286x32xf32>
    %19 = vector.extract_strided_slice %2 {offsets = [18, 0], sizes = [286, 3], strides = [1, 1]} : vector<324x3xbf16> to vector<286x3xbf16>
    %c3 = arith.constant 3 : index
    %c0_12 = arith.constant 0 : index
    %c0_13 = arith.constant 0 : index
    %20 = vector.load %arg2[%c3, %c0_12, %c0_13] : memref<9x3x32xbf16, #tpu.memory_space<vmem>>, vector<1x3x32xbf16>
    %21 = vector.shape_cast %20 : vector<1x3x32xbf16> to vector<3x32xbf16>
    %cst_14 = arith.constant dense<0.000000e+00> : vector<286x32xf32>
    %22 = tpu.matmul %19, %21, %cst_14 {dimension_numbers = #tpu.dot_dimension_numbers<[1], [0], [0], [1], [0, 0, 1, 1], [], []>} : vector<286x3xbf16>, vector<3x32xbf16>, vector<286x32xf32> -> vector<286x32xf32>
    %23 = arith.addf %18, %22 : vector<286x32xf32>
    %24 = vector.extract_strided_slice %2 {offsets = [19, 0], sizes = [286, 3], strides = [1, 1]} : vector<324x3xbf16> to vector<286x3xbf16>
    %c4 = arith.constant 4 : index
    %c0_15 = arith.constant 0 : index
    %c0_16 = arith.constant 0 : index
    %25 = vector.load %arg2[%c4, %c0_15, %c0_16] : memref<9x3x32xbf16, #tpu.memory_space<vmem>>, vector<1x3x32xbf16>
    %26 = vector.shape_cast %25 : vector<1x3x32xbf16> to vector<3x32xbf16>
    %cst_17 = arith.constant dense<0.000000e+00> : vector<286x32xf32>
    %27 = tpu.matmul %24, %26, %cst_17 {dimension_numbers = #tpu.dot_dimension_numbers<[1], [0], [0], [1], [0, 0, 1, 1], [], []>} : vector<286x3xbf16>, vector<3x32xbf16>, vector<286x32xf32> -> vector<286x32xf32>
    %28 = arith.addf %23, %27 : vector<286x32xf32>
    %29 = vector.extract_strided_slice %2 {offsets = [20, 0], sizes = [286, 3], strides = [1, 1]} : vector<324x3xbf16> to vector<286x3xbf16>
    %c5 = arith.constant 5 : index
    %c0_18 = arith.constant 0 : index
    %c0_19 = arith.constant 0 : index
    %30 = vector.load %arg2[%c5, %c0_18, %c0_19] : memref<9x3x32xbf16, #tpu.memory_space<vmem>>, vector<1x3x32xbf16>
    %31 = vector.shape_cast %30 : vector<1x3x32xbf16> to vector<3x32xbf16>
    %cst_20 = arith.constant dense<0.000000e+00> : vector<286x32xf32>
    %32 = tpu.matmul %29, %31, %cst_20 {dimension_numbers = #tpu.dot_dimension_numbers<[1], [0], [0], [1], [0, 0, 1, 1], [], []>} : vector<286x3xbf16>, vector<3x32xbf16>, vector<286x32xf32> -> vector<286x32xf32>
    %33 = arith.addf %28, %32 : vector<286x32xf32>
    %34 = vector.extract_strided_slice %2 {offsets = [36, 0], sizes = [286, 3], strides = [1, 1]} : vector<324x3xbf16> to vector<286x3xbf16>
    %c6 = arith.constant 6 : index
    %c0_21 = arith.constant 0 : index
    %c0_22 = arith.constant 0 : index
    %35 = vector.load %arg2[%c6, %c0_21, %c0_22] : memref<9x3x32xbf16, #tpu.memory_space<vmem>>, vector<1x3x32xbf16>
    %36 = vector.shape_cast %35 : vector<1x3x32xbf16> to vector<3x32xbf16>
    %cst_23 = arith.constant dense<0.000000e+00> : vector<286x32xf32>
    %37 = tpu.matmul %34, %36, %cst_23 {dimension_numbers = #tpu.dot_dimension_numbers<[1], [0], [0], [1], [0, 0, 1, 1], [], []>} : vector<286x3xbf16>, vector<3x32xbf16>, vector<286x32xf32> -> vector<286x32xf32>
    %38 = arith.addf %33, %37 : vector<286x32xf32>
    %39 = vector.extract_strided_slice %2 {offsets = [37, 0], sizes = [286, 3], strides = [1, 1]} : vector<324x3xbf16> to vector<286x3xbf16>
    %c7 = arith.constant 7 : index
    %c0_24 = arith.constant 0 : index
    %c0_25 = arith.constant 0 : index
    %40 = vector.load %arg2[%c7, %c0_24, %c0_25] : memref<9x3x32xbf16, #tpu.memory_space<vmem>>, vector<1x3x32xbf16>
    %41 = vector.shape_cast %40 : vector<1x3x32xbf16> to vector<3x32xbf16>
    %cst_26 = arith.constant dense<0.000000e+00> : vector<286x32xf32>
    %42 = tpu.matmul %39, %41, %cst_26 {dimension_numbers = #tpu.dot_dimension_numbers<[1], [0], [0], [1], [0, 0, 1, 1], [], []>} : vector<286x3xbf16>, vector<3x32xbf16>, vector<286x32xf32> -> vector<286x32xf32>
    %43 = arith.addf %38, %42 : vector<286x32xf32>
    %44 = vector.extract_strided_slice %2 {offsets = [38, 0], sizes = [286, 3], strides = [1, 1]} : vector<324x3xbf16> to vector<286x3xbf16>
    %c8 = arith.constant 8 : index
    %c0_27 = arith.constant 0 : index
    %c0_28 = arith.constant 0 : index
    %45 = vector.load %arg2[%c8, %c0_27, %c0_28] : memref<9x3x32xbf16, #tpu.memory_space<vmem>>, vector<1x3x32xbf16>
    %46 = vector.shape_cast %45 : vector<1x3x32xbf16> to vector<3x32xbf16>
    %cst_29 = arith.constant dense<0.000000e+00> : vector<286x32xf32>
    %47 = tpu.matmul %44, %46, %cst_29 {dimension_numbers = #tpu.dot_dimension_numbers<[1], [0], [0], [1], [0, 0, 1, 1], [], []>} : vector<286x3xbf16>, vector<3x32xbf16>, vector<286x32xf32> -> vector<286x32xf32>
    %48 = arith.addf %43, %47 : vector<286x32xf32>
    %c0_30 = arith.constant 0 : index
    %c0_31 = arith.constant 0 : index
    %49 = vector.load %arg3[%c0_30, %c0_31] : memref<1x32xf32, #tpu.memory_space<vmem>>, vector<1x32xf32>
    %50 = vector.broadcast %49 : vector<1x32xf32> to vector<286x32xf32>
    %51 = arith.addf %48, %50 : vector<286x32xf32>
    %cst_32 = arith.constant 0.000000e+00 : f32
    %52 = vector.broadcast %cst_32 : f32 to vector<286x32xf32>
    %53 = arith.maximumf %51, %52 : vector<286x32xf32>
    %c0_33 = arith.constant 0 : index
    %c0_34 = arith.constant 0 : index
    %c0_35 = arith.constant 0 : index
    %54 = vector.load %arg4[%c0_33, %c0_34, %c0_35] : memref<1x286x32xf32, #tpu.memory_space<vmem>>, vector<1x286x32xf32>
    %55 = vector.shape_cast %54 : vector<1x286x32xf32> to vector<286x32xf32>
    %56 = vector.shape_cast %53 : vector<286x32xf32> to vector<1x286x32xf32>
    tpu.vector_store %arg4[%c0_33, %c0_34, %c0_35], %56 {strides = array<i32>} : memref<1x286x32xf32, #tpu.memory_space<vmem>>, vector<1x286x32xf32>,
    return
  }
  func.func @transform_0(%arg0: i32) -> (i32, i32, i32) {
    %c0_i32 = arith.constant 0 : i32
    %c0_i32_0 = arith.constant 0 : i32
    %c0_i32_1 = arith.constant 0 : i32
    return %arg0, %c0_i32, %c0_i32_0 : i32, i32, i32
  }
  func.func @transform_1(%arg0: i32) -> (i32, i32, i32) {
    %c0_i32 = arith.constant 0 : i32
    %c0_i32_0 = arith.constant 0 : i32
    %c0_i32_1 = arith.constant 0 : i32
    %c0_i32_2 = arith.constant 0 : i32
    return %c0_i32, %c0_i32_0, %c0_i32_1 : i32, i32, i32
  }
  func.func @transform_2(%arg0: i32) -> (i32, i32) {
    %c0_i32 = arith.constant 0 : i32
    %c0_i32_0 = arith.constant 0 : i32
    %c0_i32_1 = arith.constant 0 : i32
    return %c0_i32, %c0_i32_0 : i32, i32
  }
  func.func @transform_3(%arg0: i32) -> (i32, i32, i32) {
    %c0_i32 = arith.constant 0 : i32
    %c0_i32_0 = arith.constant 0 : i32
    %c0_i32_1 = arith.constant 0 : i32
    return %arg0, %c0_i32, %c0_i32_0 : i32, i32, i32
  }
}

</mosaic_0001>

<llo_original>
// kernel: tpu_custom_call.1
$region0: #{tpu_custom_call.1}
  #allocation0 [shape = 'u32[]', space=smem, size = 0x4, offset = 0x4, fixed_abs, tag = 'smem constant byte address 0x4 - core index']
  #allocation1 [shape = 'u32[144,128]{1,0:T(1,128)}', space=vmem, size = 0x12000, scoped, tag = 'internal scratch']
  %s0 = inlined_call_operand.vmem [shape: f32[2,324,3], index: 0, kind: input, shape index: {}]
  %s1 = inlined_call_operand.vmem [shape: bf16[9,3,32], index: 1, kind: input, shape index: {}]
  %s2 = inlined_call_operand.vmem [shape: f32[1,32], index: 2, kind: input, shape index: {}]
  %s3 = inlined_call_operand.vmem [shape: f32[2,286,32], index: 3, kind: output, shape index: {}]
  %s4 = sld [smem:[#allocation0]]
  $region45: #{tpu_custom_call.1} parent=0
    _
  %s6 = ssub.s32 1, %s4
  %s7 = scalar_select 0, %s6, %s4
  loop: start=0, step=1, limit=4
  $region2: #{tpu_custom_call.1} parent=0 // loop_pre_header
    _
  $region3: #{tpu_custom_call.1} parent=0 // loop_header
    %s9 = sphi 0, %s13
    %p10 = scmp.ge.s32.totalorder %s9, 4
    %s19 = sphi 0, %s21
    %s22 = sphi 0, %s19
    %s23 = sphi 0, %s22
    %s39 = sphi 0, %s23
    %s43 = sphi 0, %s43
    %s45 = sphi 0, %s43
    %s46 = sphi 0, %s45
    %s60 = sphi 0, %s46
    %s64 = sphi 0, %s64
    %s66 = sphi 0, %s64
    %s67 = sphi 0, %s66
    %s81 = sphi 0, %s67
    %s87 = sphi 0, %s89
    %s90 = sphi 0, %s87
    %s91 = sphi 0, %s90
    %s107 = sphi 0, %s91
  $region4: #{tpu_custom_call.1} parent=0 // loop_header_branch
    %12 = sbr.rel (%p10) target = $region8
  $region5: #{tpu_custom_call.1} parent=0 // loop_body
    %s14 = ssub.s32 %s9, 1
    %s15 = ssub.s32 %s9, 2
    %s16 = sadd.s32 %s9, 1
    %s17 = ssub.s32 %s9, %s16
    %p18 = scmp.eq.s32.totalorder %s17, 0
    %s20 = sadd.s32 %s19, 1
    %s21 = scalar_select %p18, %s19, %s20
    %p24 = pneg %p18
    %p25 = scmp.eq.s32.totalorder %s9, 1
    %p26 = por %p24, %p25
    %p27 = scmp.ne.s32.totalorder %s19, %s22
    %p28 = scmp.eq.s32.totalorder %s9, 0
    %p29 = por %p27, %p28
    %p30 = scmp.ne.s32.totalorder %s19, %s22
    %p31 = scmp.eq.s32.totalorder %s14, 1
    %p32 = por %p30, %p31
    %p33 = scmp.ne.s32.totalorder %s22, %s23
    %p34 = scmp.eq.s32.totalorder %s14, 0
    %p35 = por %p33, %p34
    %p36 = scmp.ne.s32.totalorder %s22, %s23
    %p37 = scmp.eq.s32.totalorder %s15, 1
    %p38 = por %p36, %p37
    %p40 = scmp.ne.s32.totalorder %s23, %s39
    %p41 = scmp.eq.s32.totalorder %s15, 0
    %p42 = por %p40, %p41
    %s44 = sadd.s32 %s43, 1
    %p47 = scmp.eq.s32.totalorder %s9, 1
    %p48 = scmp.ne.s32.totalorder %s43, %s45
    %p49 = scmp.eq.s32.totalorder %s9, 0
    %p50 = por %p48, %p49
    %p51 = scmp.ne.s32.totalorder %s43, %s45
    %p52 = scmp.eq.s32.totalorder %s14, 1
    %p53 = por %p51, %p52
    %p54 = scmp.ne.s32.totalorder %s45, %s46
    %p55 = scmp.eq.s32.totalorder %s14, 0
    %p56 = por %p54, %p55
    %p57 = scmp.ne.s32.totalorder %s45, %s46
    %p58 = scmp.eq.s32.totalorder %s15, 1
    %p59 = por %p57, %p58
    %p61 = scmp.ne.s32.totalorder %s46, %s60
    %p62 = scmp.eq.s32.totalorder %s15, 0
    %p63 = por %p61, %p62
    %s65 = sadd.s32 %s64, 1
    %p68 = scmp.eq.s32.totalorder %s9, 1
    %p69 = scmp.ne.s32.totalorder %s64, %s66
    %p70 = scmp.eq.s32.totalorder %s9, 0
    %p71 = por %p69, %p70
    %p72 = scmp.ne.s32.totalorder %s64, %s66
    %p73 = scmp.eq.s32.totalorder %s14, 1
    %p74 = por %p72, %p73
    %p75 = scmp.ne.s32.totalorder %s66, %s67
    %p76 = scmp.eq.s32.totalorder %s14, 0
    %p77 = por %p75, %p76
    %p78 = scmp.ne.s32.totalorder %s66, %s67
    %p79 = scmp.eq.s32.totalorder %s15, 1
    %p80 = por %p78, %p79
    %p82 = scmp.ne.s32.totalorder %s67, %s81
    %p83 = scmp.eq.s32.totalorder %s15, 0
    %p84 = por %p82, %p83
    %s85 = ssub.s32 %s9, %s16
    %p86 = scmp.eq.s32.totalorder %s85, 0
    %s88 = sadd.s32 %s87, 1
    %s89 = scalar_select %p86, %s87, %s88
    %p92 = pneg %p86
    %p93 = scmp.eq.s32.totalorder %s9, 1
    %p94 = por %p92, %p93
    %p95 = scmp.ne.s32.totalorder %s87, %s90
    %p96 = scmp.eq.s32.totalorder %s9, 0
    %p97 = por %p95, %p96
    %p98 = scmp.ne.s32.totalorder %s87, %s90
    %p99 = scmp.eq.s32.totalorder %s14, 1
    %p100 = por %p98, %p99
    %p101 = scmp.ne.s32.totalorder %s90, %s91
    %p102 = scmp.eq.s32.totalorder %s14, 0
    %p103 = por %p101, %p102
    %p104 = scmp.ne.s32.totalorder %s90, %s91
    %p105 = scmp.eq.s32.totalorder %s15, 1
    %p106 = por %p104, %p105
    %p108 = scmp.ne.s32.totalorder %s91, %s107
    %p109 = scmp.eq.s32.totalorder %s15, 0
    %p110 = por %p108, %p109
    %p111 = scmp.le.s32.totalorder 1, %s9
    %p112 = scmp.lt.s32.totalorder %s9, 3
    %p113 = pnand %p111, %p112
    %p114 = pneg %p113
    // Predicated region
    $region9: #{tpu_custom_call.1} parent=5 // pred_check
      _
    $region10: #{tpu_custom_call.1} parent=5 // pred_check_branch
      %116 = sbr.rel (%p113) target = $region12
    $region11: #{tpu_custom_call.1} parent=5 // pred_region
      %s117 = ssub.s32 %s9, 1
      // Predicated region
      $region13: #{tpu_custom_call.1} parent=11 // pred_check
        %p118 = pneg %p56
      $region14: #{tpu_custom_call.1} parent=11 // pred_check_branch
        %120 = sbr.rel (%p118) target = $region16
      $region15: #{tpu_custom_call.1} parent=11 // pred_region
        _
      $region16: #{tpu_custom_call.1} parent=11 // pred_fallthru
        _
      // Predicated region
      $region17: #{tpu_custom_call.1} parent=11 // pred_check
        %p121 = pneg %p77
      $region18: #{tpu_custom_call.1} parent=11 // pred_check_branch
        %123 = sbr.rel (%p121) target = $region20
      $region19: #{tpu_custom_call.1} parent=11 // pred_region
        _
      $region20: #{tpu_custom_call.1} parent=11 // pred_fallthru
        _
    $region12: #{tpu_custom_call.1} parent=5 // pred_fallthru
      _
    %p124 = scmp.lt.s32.totalorder %s9, 2
    // Predicated region
    $region21: #{tpu_custom_call.1} parent=5 // pred_check
      %p125 = pneg %p124
    $region22: #{tpu_custom_call.1} parent=5 // pred_check_branch
      %127 = sbr.rel (%p125) target = $region24
    $region23: #{tpu_custom_call.1} parent=5 // pred_region
      // Predicated region
      $region25: #{tpu_custom_call.1} parent=23 // pred_check
        %p128 = pneg %p29
      $region26: #{tpu_custom_call.1} parent=23 // pred_check_branch
        %130 = sbr.rel (%p128) target = $region28
      $region27: #{tpu_custom_call.1} parent=23 // pred_region
        %p131 = scmp.lt.s32.totalorder %s9, 1
        %s132 = scalar_select %p131, %s9, 1
        %s133 = smul.addr %s132, 41
        %s134 = smul.addr %s133, 8
        %s135 = scalar_lea.vmem %s0, %s134
      $region28: #{tpu_custom_call.1} parent=23 // pred_fallthru
        _
    $region24: #{tpu_custom_call.1} parent=5 // pred_fallthru
      _
    %p136 = scmp.le.s32.totalorder 1, %s9
    %p137 = scmp.lt.s32.totalorder %s9, 3
    %p138 = pnand %p136, %p137
    %p139 = pneg %p138
    // Predicated region
    $region29: #{tpu_custom_call.1} parent=5 // pred_check
      _
    $region30: #{tpu_custom_call.1} parent=5 // pred_check_branch
      %141 = sbr.rel (%p138) target = $region32
    $region31: #{tpu_custom_call.1} parent=5 // pred_region
      %s142 = ssub.s32 %s9, 1
      %p143 = scmp.lt.s32.totalorder %s14, 1
      %s144 = scalar_select %p143, %s14, 1
      %s145 = smul.addr %s144, 41
      %s146 = smul.addr %s145, 8
      %s147 = scalar_lea.vmem %s0, %s146
      %p148 = pneg %p35
      %p149 = pneg %p32
      %p150 = pneg %p56
      %p151 = pneg %p53
      %p152 = pneg %p77
      %p153 = pneg %p74
      %p154 = pneg %p103
      %p155 = pneg %p100
      %p156 = scmp.lt.s32.totalorder %s14, 1
      %s157 = scalar_select %p156, %s14, 1
      %s158 = smul.addr %s157, 36
      %s159 = smul.addr %s158, 8
      %s160 = scalar_lea.vmem %s3, %s159
      %p161 = scmp.lt.s32.totalorder %s14, 1
      %s162 = scalar_select %p161, %s14, 1
      %s163 = smul.addr %s162, 41
      %s164 = smul.addr %s163, 8
      %s165 = scalar_lea.vmem %s0, %s164
      %p166 = scmp.lt.s32.totalorder %s14, 1
      %s167 = scalar_select %p166, %s14, 1
      %s168 = smul.addr %s167, 36
      %s169 = smul.addr %s168, 8
      %s170 = scalar_lea.vmem %s3, %s169
      %v172 = vld [vmem:[%s165] sm:$0xff]
      %v173 = vld [vmem:[%s165 + $0x8] sm:$0xff]
      %v174 = vld [vmem:[%s165 + $0x10] sm:$0xff]
      %v175 = vld [vmem:[%s165 + $0x18] sm:$0xff]
      %v176 = vld [vmem:[%s165 + $0x20] sm:$0xff]
      %v177 = vld [vmem:[%s165 + $0x28] sm:$0xff]
      %v178 = vld [vmem:[%s165 + $0x30] sm:$0xff]
      %v179 = vld [vmem:[%s165 + $0x38] sm:$0xff]
      %v180 = vld [vmem:[%s165 + $0x40] sm:$0xff]
      %v181 = vld [vmem:[%s165 + $0x48] sm:$0xff]
      %v182 = vld [vmem:[%s165 + $0x50] sm:$0xff]
      %v183 = vld [vmem:[%s165 + $0x58] sm:$0xff]
      %v184 = vld [vmem:[%s165 + $0x60] sm:$0xff]
      %v185 = vld [vmem:[%s165 + $0x68] sm:$0xff]
      %v186 = vld [vmem:[%s165 + $0x70] sm:$0xff]
      %v187 = vld [vmem:[%s165 + $0x78] sm:$0xff]
      %v188 = vld [vmem:[%s165 + $0x80] sm:$0xff]
      %v189 = vld [vmem:[%s165 + $0x88] sm:$0xff]
      %v190 = vld [vmem:[%s165 + $0x90] sm:$0xff]
      %v191 = vld [vmem:[%s165 + $0x98] sm:$0xff]
      %v192 = vld [vmem:[%s165 + $0xa0] sm:$0xff]
      %v193 = vld [vmem:[%s165 + $0xa8] sm:$0xff]
      %v194 = vld [vmem:[%s165 + $0xb0] sm:$0xff]
      %v195 = vld [vmem:[%s165 + $0xb8] sm:$0xff]
      %v196 = vld [vmem:[%s165 + $0xc0] sm:$0xff]
      %v197 = vld [vmem:[%s165 + $0xc8] sm:$0xff]
      %v198 = vld [vmem:[%s165 + $0xd0] sm:$0xff]
      %v199 = vld [vmem:[%s165 + $0xd8] sm:$0xff]
      %v200 = vld [vmem:[%s165 + $0xe0] sm:$0xff]
      %v201 = vld [vmem:[%s165 + $0xe8] sm:$0xff]
      %v202 = vld [vmem:[%s165 + $0xf0] sm:$0xff]
      %v203 = vld [vmem:[%s165 + $0xf8] sm:$0xff]
      %v204 = vld [vmem:[%s165 + $0x100] sm:$0xff]
      %v205 = vld [vmem:[%s165 + $0x108] sm:$0xff]
      %v206 = vld [vmem:[%s165 + $0x110] sm:$0xff]
      %v207 = vld [vmem:[%s165 + $0x118] sm:$0xff]
      %v208 = vld [vmem:[%s165 + $0x120] sm:$0xff]
      %v209 = vld [vmem:[%s165 + $0x128] sm:$0xff]
      %v210 = vld [vmem:[%s165 + $0x130] sm:$0xff]
      %v211 = vld [vmem:[%s165 + $0x138] sm:$0xff]
      %v212 = vld [vmem:[%s165 + $0x140] sm:$0xf]
      %v213 = vpack.c.bf16 %v173, %v172
      %v214 = vpack.c.bf16 %v175, %v174
      %v215 = vpack.c.bf16 %v177, %v176
      %v216 = vpack.c.bf16 %v179, %v178
      %v217 = vpack.c.bf16 %v181, %v180
      %v218 = vpack.c.bf16 %v183, %v182
      %v219 = vpack.c.bf16 %v185, %v184
      %v220 = vpack.c.bf16 %v187, %v186
      %v221 = vpack.c.bf16 %v189, %v188
      %v222 = vpack.c.bf16 %v191, %v190
      %v223 = vpack.c.bf16 %v193, %v192
      %v224 = vpack.c.bf16 %v195, %v194
      %v225 = vpack.c.bf16 %v197, %v196
      %v226 = vpack.c.bf16 %v199, %v198
      %v227 = vpack.c.bf16 %v201, %v200
      %v228 = vpack.c.bf16 %v203, %v202
      %v229 = vpack.c.bf16 %v205, %v204
      %v230 = vpack.c.bf16 %v207, %v206
      %v231 = vpack.c.bf16 %v209, %v208
      %v232 = vpack.c.bf16 %v211, %v210
      %v233 = vpack.c.bf16 %v212, %v212
      %v234 = vld [vmem:[%s1] sm:$0x3]
      %s235 = scalar_lea.vmem %s1, 2
      %v236 = vld [vmem:[%s235] sm:$0x3]
      %vm237 = vsmask.f32 7424
      %v239 = vshrl.u32 %v213, 16
      %v241 = vshll.u32 %v213, 16
      %v243 = vrot.slane %v241, 1
      %v244 = vor.u32 %v239, %v243
      %v246 = vshll.u32 %v214, 16
      %v248 = vrot.slane %v246, 1
      %v249 = vsel %vm237, %v244, %v248
      %v250 = vshrl.u32 %v214, 16
      %v252 = vor.u32 %v250, %v248
      %v254 = vshll.u32 %v215, 16
      %v256 = vrot.slane %v254, 1
      %v257 = vsel %vm237, %v252, %v256
      %v258 = vshrl.u32 %v215, 16
      %v260 = vor.u32 %v258, %v256
      %v262 = vshll.u32 %v216, 16
      %v264 = vrot.slane %v262, 1
      %v265 = vsel %vm237, %v260, %v264
      %v266 = vshrl.u32 %v216, 16
      %v268 = vor.u32 %v266, %v264
      %v270 = vshll.u32 %v217, 16
      %v272 = vrot.slane %v270, 1
      %v273 = vsel %vm237, %v268, %v272
      %v274 = vshrl.u32 %v217, 16
      %v276 = vor.u32 %v274, %v272
      %v278 = vshll.u32 %v218, 16
      %v280 = vrot.slane %v278, 1
      %v281 = vsel %vm237, %v276, %v280
      %v282 = vshrl.u32 %v218, 16
      %v284 = vor.u32 %v282, %v280
      %v286 = vshll.u32 %v219, 16
      %v288 = vrot.slane %v286, 1
      %v289 = vsel %vm237, %v284, %v288
      %v290 = vshrl.u32 %v219, 16
      %v292 = vor.u32 %v290, %v288
      %v294 = vshll.u32 %v220, 16
      %v296 = vrot.slane %v294, 1
      %v297 = vsel %vm237, %v292, %v296
      %v298 = vshrl.u32 %v220, 16
      %v300 = vor.u32 %v298, %v296
      %v302 = vshll.u32 %v221, 16
      %v304 = vrot.slane %v302, 1
      %v305 = vsel %vm237, %v300, %v304
      %v306 = vshrl.u32 %v221, 16
      %v308 = vor.u32 %v306, %v304
      %v310 = vshll.u32 %v222, 16
      %v312 = vrot.slane %v310, 1
      %v313 = vsel %vm237, %v308, %v312
      %v314 = vshrl.u32 %v222, 16
      %v316 = vor.u32 %v314, %v312
      %v318 = vshll.u32 %v223, 16
      %v320 = vrot.slane %v318, 1
      %v321 = vsel %vm237, %v316, %v320
      %v322 = vshrl.u32 %v223, 16
      %v324 = vor.u32 %v322, %v320
      %v326 = vshll.u32 %v224, 16
      %v328 = vrot.slane %v326, 1
      %v329 = vsel %vm237, %v324, %v328
      %v330 = vshrl.u32 %v224, 16
      %v332 = vor.u32 %v330, %v328
      %v334 = vshll.u32 %v225, 16
      %v336 = vrot.slane %v334, 1
      %v337 = vsel %vm237, %v332, %v336
      %v338 = vshrl.u32 %v225, 16
      %v340 = vor.u32 %v338, %v336
      %v342 = vshll.u32 %v226, 16
      %v344 = vrot.slane %v342, 1
      %v345 = vsel %vm237, %v340, %v344
      %v346 = vshrl.u32 %v226, 16
      %v348 = vor.u32 %v346, %v344
      %v350 = vshll.u32 %v227, 16
      %v352 = vrot.slane %v350, 1
      %v353 = vsel %vm237, %v348, %v352
      %v354 = vshrl.u32 %v227, 16
      %v356 = vor.u32 %v354, %v352
      %v358 = vshll.u32 %v228, 16
      %v360 = vrot.slane %v358, 1
      %v361 = vsel %vm237, %v356, %v360
      %v362 = vshrl.u32 %v228, 16
      %v364 = vor.u32 %v362, %v360
      %v366 = vshll.u32 %v229, 16
      %v368 = vrot.slane %v366, 1
      %v369 = vsel %vm237, %v364, %v368
      %v370 = vshrl.u32 %v229, 16
      %v372 = vor.u32 %v370, %v368
      %v374 = vshll.u32 %v230, 16
      %v376 = vrot.slane %v374, 1
      %v377 = vsel %vm237, %v372, %v376
      %v378 = vshrl.u32 %v230, 16
      %v380 = vor.u32 %v378, %v376
      %vm381 = vcmask 23552
      %v383 = vsel %vm381, %v249, 0
      %v386 = vsel %vm381, %v257, 0
      %v389 = vsel %vm381, %v265, 0
      %v392 = vsel %vm381, %v273, 0
      %v395 = vsel %vm381, %v281, 0
      %v398 = vsel %vm381, %v289, 0
      %v401 = vsel %vm381, %v297, 0
      %v404 = vsel %vm381, %v305, 0
      %v407 = vsel %vm381, %v313, 0
      %v410 = vsel %vm381, %v321, 0
      %v413 = vsel %vm381, %v329, 0
      %v416 = vsel %vm381, %v337, 0
      %v419 = vsel %vm381, %v345, 0
      %v422 = vsel %vm381, %v353, 0
      %v425 = vsel %vm381, %v361, 0
      %v428 = vsel %vm381, %v369, 0
      %v431 = vsel %vm381, %v377, 0
      %v434 = vsel %vm381, %v380, 0
      %vm436 = vcmask 1040384
      %vm437 = vcmask 1041408
      %v438 = vsel %vm436, 4294967295, 65535
      %v439 = vsel %vm437, %v438, 0
      %v441 = vand.u32 %v236, %v439
      %443 = vmatprep.subr.bf16.mxu0 0
      %444 = vmatpush1.bf16.msra.mxu0 0
      %445 = vmatprep.subr.bf16.mxu0 0
      %446 = vmatpush1.bf16.msra.mxu0 0
      %447 = vmatprep.subr.bf16.mxu0 0
      %448 = vmatpush1.bf16.msra.mxu0 0
      %449 = vmatprep.subr.bf16.mxu0 0
      %450 = vmatpush1.bf16.msra.mxu0 0
      %451 = vmatprep.subr.bf16.mxu0 0
      %452 = vmatpush1.bf16.msra.mxu0 0
      %453 = vmatprep.subr.bf16.mxu0 0
      %454 = vmatpush1.bf16.msra.mxu0 0
      %455 = vmatprep.subr.bf16.mxu0 0
      %456 = vmatpush1.bf16.msra.mxu0 0
      %457 = vmatprep.subr.bf16.mxu0 0
      %458 = vmatpush1.bf16.msra.mxu0 %v441
      %459 = vmatprep.subr.bf16.mxu0 0
      %460 = vmatpush2.bf16.msra.mxu0 0
      %461 = vmatprep.subr.bf16.mxu0 0
      %462 = vmatpush2.bf16.msra.mxu0 0
      %463 = vmatprep.subr.bf16.mxu0 0
      %464 = vmatpush2.bf16.msra.mxu0 0
      %465 = vmatprep.subr.bf16.mxu0 0
      %466 = vmatpush2.bf16.msra.mxu0 0
      %467 = vmatprep.subr.bf16.mxu0 0
      %468 = vmatpush2.bf16.msra.mxu0 0
      %469 = vmatprep.subr.bf16.mxu0 0
      %470 = vmatpush2.bf16.msra.mxu0 0
      %471 = vmatprep.subr.bf16.mxu0 0
      %472 = vmatpush2.bf16.msra.mxu0 0
      %473 = vmatprep.subr.bf16.mxu0 0
      %474 = vmatpush2.bf16.msra.mxu0 0
      %475 = vmatprep.mubr.bf16.mxu0 0
      %476 = vmatmul.mubr.bf16.gmra.mxu0 %v383
      %v477 = vpop.f32.mrf.mxu0
      %v478 = vadd.f32 0.0, %v477
      %v479 = vpop.f32.mrf.mxu0
      %v480 = vpop.f32.mrf.mxu0
      %v481 = vadd.f32 0.0, %v480
      %v482 = vpop.f32.mrf.mxu0
      %483 = vmatprep.mubr.bf16.mxu0 0
      %484 = vmatmul.mubr.bf16.gmra.mxu0 %v386
      %v485 = vpop.f32.mrf.mxu0
      %v486 = vadd.f32 0.0, %v485
      %v487 = vpop.f32.mrf.mxu0
      %v488 = vpop.f32.mrf.mxu0
      %v489 = vadd.f32 0.0, %v488
      %v490 = vpop.f32.mrf.mxu0
      %491 = vmatprep.mubr.bf16.mxu0 0
      %492 = vmatmul.mubr.bf16.gmra.mxu0 %v389
      %v493 = vpop.f32.mrf.mxu0
      %v494 = vadd.f32 0.0, %v493
      %v495 = vpop.f32.mrf.mxu0
      %v496 = vpop.f32.mrf.mxu0
      %v497 = vadd.f32 0.0, %v496
      %v498 = vpop.f32.mrf.mxu0
      %499 = vmatprep.mubr.bf16.mxu0 0
      %500 = vmatmul.mubr.bf16.gmra.mxu0 %v392
      %v501 = vpop.f32.mrf.mxu0
      %v502 = vadd.f32 0.0, %v501
      %v503 = vpop.f32.mrf.mxu0
      %v504 = vpop.f32.mrf.mxu0
      %v505 = vadd.f32 0.0, %v504
      %v506 = vpop.f32.mrf.mxu0
      %507 = vmatprep.mubr.bf16.mxu0 0
      %508 = vmatmul.mubr.bf16.gmra.mxu0 %v395
      %v509 = vpop.f32.mrf.mxu0
      %v510 = vadd.f32 0.0, %v509
      %v511 = vpop.f32.mrf.mxu0
      %v512 = vpop.f32.mrf.mxu0
      %v513 = vadd.f32 0.0, %v512
      %v514 = vpop.f32.mrf.mxu0
      %515 = vmatprep.mubr.bf16.mxu0 0
      %516 = vmatmul.mubr.bf16.gmra.mxu0 %v398
      %v517 = vpop.f32.mrf.mxu0
      %v518 = vadd.f32 0.0, %v517
      %v519 = vpop.f32.mrf.mxu0
      %v520 = vpop.f32.mrf.mxu0
      %v521 = vadd.f32 0.0, %v520
      %v522 = vpop.f32.mrf.mxu0
      %523 = vmatprep.mubr.bf16.mxu0 0
      %524 = vmatmul.mubr.bf16.gmra.mxu0 %v401
      %v525 = vpop.f32.mrf.mxu0
      %v526 = vadd.f32 0.0, %v525
      %v527 = vpop.f32.mrf.mxu0
      %v528 = vpop.f32.mrf.mxu0
      %v529 = vadd.f32 0.0, %v528
      %v530 = vpop.f32.mrf.mxu0
      %531 = vmatprep.mubr.bf16.mxu0 0
      %532 = vmatmul.mubr.bf16.gmra.mxu0 %v404
      %v533 = vpop.f32.mrf.mxu0
      %v534 = vadd.f32 0.0, %v533
      %v535 = vpop.f32.mrf.mxu0
      %v536 = vpop.f32.mrf.mxu0
      %v537 = vadd.f32 0.0, %v536
      %v538 = vpop.f32.mrf.mxu0
      %539 = vmatprep.mubr.bf16.mxu0 0
      %540 = vmatmul.mubr.bf16.gmra.mxu0 %v407
      %v541 = vpop.f32.mrf.mxu0
      %v542 = vadd.f32 0.0, %v541
      %v543 = vpop.f32.mrf.mxu0
      %v544 = vpop.f32.mrf.mxu0
      %v545 = vadd.f32 0.0, %v544
      %v546 = vpop.f32.mrf.mxu0
      %547 = vmatprep.mubr.bf16.mxu0 0
      %548 = vmatmul.mubr.bf16.gmra.mxu0 %v410
      %v549 = vpop.f32.mrf.mxu0
      %v550 = vadd.f32 0.0, %v549
      %v551 = vpop.f32.mrf.mxu0
      %v552 = vpop.f32.mrf.mxu0
      %v553 = vadd.f32 0.0, %v552
      %v554 = vpop.f32.mrf.mxu0
      %555 = vmatprep.mubr.bf16.mxu0 0
      %556 = vmatmul.mubr.bf16.gmra.mxu0 %v413
      %v557 = vpop.f32.mrf.mxu0
      %v558 = vadd.f32 0.0, %v557
      %v559 = vpop.f32.mrf.mxu0
      %v560 = vpop.f32.mrf.mxu0
      %v561 = vadd.f32 0.0, %v560
      %v562 = vpop.f32.mrf.mxu0
      %563 = vmatprep.mubr.bf16.mxu0 0
      %564 = vmatmul.mubr.bf16.gmra.mxu0 %v416
      %v565 = vpop.f32.mrf.mxu0
      %v566 = vadd.f32 0.0, %v565
      %v567 = vpop.f32.mrf.mxu0
      %v568 = vpop.f32.mrf.mxu0
      %v569 = vadd.f32 0.0, %v568
      %v570 = vpop.f32.mrf.mxu0
      %571 = vmatprep.mubr.bf16.mxu0 0
      %572 = vmatmul.mubr.bf16.gmra.mxu0 %v419
      %v573 = vpop.f32.mrf.mxu0
      %v574 = vadd.f32 0.0, %v573
      %v575 = vpop.f32.mrf.mxu0
      %v576 = vpop.f32.mrf.mxu0
      %v577 = vadd.f32 0.0, %v576
      %v578 = vpop.f32.mrf.mxu0
      %579 = vmatprep.mubr.bf16.mxu0 0
      %580 = vmatmul.mubr.bf16.gmra.mxu0 %v422
      %v581 = vpop.f32.mrf.mxu0
      %v582 = vadd.f32 0.0, %v581
      %v583 = vpop.f32.mrf.mxu0
      %v584 = vpop.f32.mrf.mxu0
      %v585 = vadd.f32 0.0, %v584
      %v586 = vpop.f32.mrf.mxu0
      %587 = vmatprep.mubr.bf16.mxu0 0
      %588 = vmatmul.mubr.bf16.gmra.mxu0 %v425
      %v589 = vpop.f32.mrf.mxu0
      %v590 = vadd.f32 0.0, %v589
      %v591 = vpop.f32.mrf.mxu0
      %v592 = vpop.f32.mrf.mxu0
      %v593 = vadd.f32 0.0, %v592
      %v594 = vpop.f32.mrf.mxu0
      %595 = vmatprep.mubr.bf16.mxu0 0
      %596 = vmatmul.mubr.bf16.gmra.mxu0 %v428
      %v597 = vpop.f32.mrf.mxu0
      %v598 = vadd.f32 0.0, %v597
      %v599 = vpop.f32.mrf.mxu0
      %v600 = vpop.f32.mrf.mxu0
      %v601 = vadd.f32 0.0, %v600
      %v602 = vpop.f32.mrf.mxu0
      %603 = vmatprep.mubr.bf16.mxu0 0
      %604 = vmatmul.mubr.bf16.gmra.mxu0 %v431
      %v605 = vpop.f32.mrf.mxu0
      %v606 = vadd.f32 0.0, %v605
      %v607 = vpop.f32.mrf.mxu0
      %v608 = vpop.f32.mrf.mxu0
      %v609 = vadd.f32 0.0, %v608
      %v610 = vpop.f32.mrf.mxu0
      %611 = vmatprep.mubr.bf16.mxu0 0
      %612 = vmatmul.mubr.bf16.gmra.mxu0 %v434
      %v613 = vpop.f32.mrf.mxu0
      %v614 = vadd.f32 0.0, %v613
      %v615 = vpop.f32.mrf.mxu0
      %v616 = vpop.f32.mrf.mxu0
      %v617 = vadd.f32 0.0, %v616
      %v618 = vpop.f32.mrf.mxu0
      %619 = vdwg.mxu0
      %v620 = vsel %vm381, %v213, 0
      %v622 = vsel %vm381, %v214, 0
      %v624 = vsel %vm381, %v215, 0
      %v626 = vsel %vm381, %v216, 0
      %v628 = vsel %vm381, %v217, 0
      %v630 = vsel %vm381, %v218, 0
      %v632 = vsel %vm381, %v219, 0
      %v634 = vsel %vm381, %v220, 0
      %v636 = vsel %vm381, %v221, 0
      %v638 = vsel %vm381, %v222, 0
      %v640 = vsel %vm381, %v223, 0
      %v642 = vsel %vm381, %v224, 0
      %v644 = vsel %vm381, %v225, 0
      %v646 = vsel %vm381, %v226, 0
      %v648 = vsel %vm381, %v227, 0
      %v650 = vsel %vm381, %v228, 0
      %v652 = vsel %vm381, %v229, 0
      %v654 = vsel %vm381, %v230, 0
      %v657 = vand.u32 %v234, %v439
      %659 = vmatprep.subr.bf16.mxu0 0
      %660 = vmatpush1.bf16.msra.mxu0 0
      %661 = vmatprep.subr.bf16.mxu0 0
      %662 = vmatpush1.bf16.msra.mxu0 0
      %663 = vmatprep.subr.bf16.mxu0 0
      %664 = vmatpush1.bf16.msra.mxu0 0
      %665 = vmatprep.subr.bf16.mxu0 0
      %666 = vmatpush1.bf16.msra.mxu0 0
      %667 = vmatprep.subr.bf16.mxu0 0
      %668 = vmatpush1.bf16.msra.mxu0 0
      %669 = vmatprep.subr.bf16.mxu0 0
      %670 = vmatpush1.bf16.msra.mxu0 0
      %671 = vmatprep.subr.bf16.mxu0 0
      %672 = vmatpush1.bf16.msra.mxu0 0
      %673 = vmatprep.subr.bf16.mxu0 0
      %674 = vmatpush1.bf16.msra.mxu0 %v657
      %675 = vmatprep.subr.bf16.mxu0 0
      %676 = vmatpush2.bf16.msra.mxu0 0
      %677 = vmatprep.subr.bf16.mxu0 0
      %678 = vmatpush2.bf16.msra.mxu0 0
      %679 = vmatprep.subr.bf16.mxu0 0
      %680 = vmatpush2.bf16.msra.mxu0 0
      %681 = vmatprep.subr.bf16.mxu0 0
      %682 = vmatpush2.bf16.msra.mxu0 0
      %683 = vmatprep.subr.bf16.mxu0 0
      %684 = vmatpush2.bf16.msra.mxu0 0
      %685 = vmatprep.subr.bf16.mxu0 0
      %686 = vmatpush2.bf16.msra.mxu0 0
      %687 = vmatprep.subr.bf16.mxu0 0
      %688 = vmatpush2.bf16.msra.mxu0 0
      %689 = vmatprep.subr.bf16.mxu0 0
      %690 = vmatpush2.bf16.msra.mxu0 0
      %691 = vmatprep.mubr.bf16.mxu0 0
      %692 = vmatmul.mubr.bf16.gmra.mxu0 %v620
      %v693 = vpop.f32.mrf.mxu0
      %v694 = vadd.f32 %v478, %v693
      %v695 = vpop.f32.mrf.mxu0
      %v696 = vpop.f32.mrf.mxu0
      %v697 = vadd.f32 %v481, %v696
      %v698 = vpop.f32.mrf.mxu0
      %699 = vmatprep.mubr.bf16.mxu0 0
      %700 = vmatmul.mubr.bf16.gmra.mxu0 %v622
      %v701 = vpop.f32.mrf.mxu0
      %v702 = vadd.f32 %v486, %v701
      %v703 = vpop.f32.mrf.mxu0
      %v704 = vpop.f32.mrf.mxu0
      %v705 = vadd.f32 %v489, %v704
      %v706 = vpop.f32.mrf.mxu0
      %707 = vmatprep.mubr.bf16.mxu0 0
      %708 = vmatmul.mubr.bf16.gmra.mxu0 %v624
      %v709 = vpop.f32.mrf.mxu0
      %v710 = vadd.f32 %v494, %v709
      %v711 = vpop.f32.mrf.mxu0
      %v712 = vpop.f32.mrf.mxu0
      %v713 = vadd.f32 %v497, %v712
      %v714 = vpop.f32.mrf.mxu0
      %715 = vmatprep.mubr.bf16.mxu0 0
      %716 = vmatmul.mubr.bf16.gmra.mxu0 %v626
      %v717 = vpop.f32.mrf.mxu0
      %v718 = vadd.f32 %v502, %v717
      %v719 = vpop.f32.mrf.mxu0
      %v720 = vpop.f32.mrf.mxu0
      %v721 = vadd.f32 %v505, %v720
      %v722 = vpop.f32.mrf.mxu0
      %723 = vmatprep.mubr.bf16.mxu0 0
      %724 = vmatmul.mubr.bf16.gmra.mxu0 %v628
      %v725 = vpop.f32.mrf.mxu0
      %v726 = vadd.f32 %v510, %v725
      %v727 = vpop.f32.mrf.mxu0
      %v728 = vpop.f32.mrf.mxu0
      %v729 = vadd.f32 %v513, %v728
      %v730 = vpop.f32.mrf.mxu0
      %731 = vmatprep.mubr.bf16.mxu0 0
      %732 = vmatmul.mubr.bf16.gmra.mxu0 %v630
      %v733 = vpop.f32.mrf.mxu0
      %v734 = vadd.f32 %v518, %v733
      %v735 = vpop.f32.mrf.mxu0
      %v736 = vpop.f32.mrf.mxu0
      %v737 = vadd.f32 %v521, %v736
      %v738 = vpop.f32.mrf.mxu0
      %739 = vmatprep.mubr.bf16.mxu0 0
      %740 = vmatmul.mubr.bf16.gmra.mxu0 %v632
      %v741 = vpop.f32.mrf.mxu0
      %v742 = vadd.f32 %v526, %v741
      %v743 = vpop.f32.mrf.mxu0
      %v744 = vpop.f32.mrf.mxu0
      %v745 = vadd.f32 %v529, %v744
      %v746 = vpop.f32.mrf.mxu0
      %747 = vmatprep.mubr.bf16.mxu0 0
      %748 = vmatmul.mubr.bf16.gmra.mxu0 %v634
      %v749 = vpop.f32.mrf.mxu0
      %v750 = vadd.f32 %v534, %v749
      %v751 = vpop.f32.mrf.mxu0
      %v752 = vpop.f32.mrf.mxu0
      %v753 = vadd.f32 %v537, %v752
      %v754 = vpop.f32.mrf.mxu0
      %755 = vmatprep.mubr.bf16.mxu0 0
      %756 = vmatmul.mubr.bf16.gmra.mxu0 %v636
      %v757 = vpop.f32.mrf.mxu0
      %v758 = vadd.f32 %v542, %v757
      %v759 = vpop.f32.mrf.mxu0
      %v760 = vpop.f32.mrf.mxu0
      %v761 = vadd.f32 %v545, %v760
      %v762 = vpop.f32.mrf.mxu0
      %763 = vmatprep.mubr.bf16.mxu0 0
      %764 = vmatmul.mubr.bf16.gmra.mxu0 %v638
      %v765 = vpop.f32.mrf.mxu0
      %v766 = vadd.f32 %v550, %v765
      %v767 = vpop.f32.mrf.mxu0
      %v768 = vpop.f32.mrf.mxu0
      %v769 = vadd.f32 %v553, %v768
      %v770 = vpop.f32.mrf.mxu0
      %771 = vmatprep.mubr.bf16.mxu0 0
      %772 = vmatmul.mubr.bf16.gmra.mxu0 %v640
      %v773 = vpop.f32.mrf.mxu0
      %v774 = vadd.f32 %v558, %v773
      %v775 = vpop.f32.mrf.mxu0
      %v776 = vpop.f32.mrf.mxu0
      %v777 = vadd.f32 %v561, %v776
      %v778 = vpop.f32.mrf.mxu0
      %779 = vmatprep.mubr.bf16.mxu0 0
      %780 = vmatmul.mubr.bf16.gmra.mxu0 %v642
      %v781 = vpop.f32.mrf.mxu0
      %v782 = vadd.f32 %v566, %v781
      %v783 = vpop.f32.mrf.mxu0
      %v784 = vpop.f32.mrf.mxu0
      %v785 = vadd.f32 %v569, %v784
      %v786 = vpop.f32.mrf.mxu0
      %787 = vmatprep.mubr.bf16.mxu0 0
      %788 = vmatmul.mubr.bf16.gmra.mxu0 %v644
      %v789 = vpop.f32.mrf.mxu0
      %v790 = vadd.f32 %v574, %v789
      %v791 = vpop.f32.mrf.mxu0
      %v792 = vpop.f32.mrf.mxu0
      %v793 = vadd.f32 %v577, %v792
      %v794 = vpop.f32.mrf.mxu0
      %795 = vmatprep.mubr.bf16.mxu0 0
      %796 = vmatmul.mubr.bf16.gmra.mxu0 %v646
      %v797 = vpop.f32.mrf.mxu0
      %v798 = vadd.f32 %v582, %v797
      %v799 = vpop.f32.mrf.mxu0
      %v800 = vpop.f32.mrf.mxu0
      %v801 = vadd.f32 %v585, %v800
      %v802 = vpop.f32.mrf.mxu0
      %803 = vmatprep.mubr.bf16.mxu0 0
      %804 = vmatmul.mubr.bf16.gmra.mxu0 %v648
      %v805 = vpop.f32.mrf.mxu0
      %v806 = vadd.f32 %v590, %v805
      %v807 = vpop.f32.mrf.mxu0
      %v808 = vpop.f32.mrf.mxu0
      %v809 = vadd.f32 %v593, %v808
      %v810 = vpop.f32.mrf.mxu0
      %811 = vmatprep.mubr.bf16.mxu0 0
      %812 = vmatmul.mubr.bf16.gmra.mxu0 %v650
      %v813 = vpop.f32.mrf.mxu0
      %v814 = vadd.f32 %v598, %v813
      %v815 = vpop.f32.mrf.mxu0
      %v816 = vpop.f32.mrf.mxu0
      %v817 = vadd.f32 %v601, %v816
      %v818 = vpop.f32.mrf.mxu0
      %819 = vmatprep.mubr.bf16.mxu0 0
      %820 = vmatmul.mubr.bf16.gmra.mxu0 %v652
      %v821 = vpop.f32.mrf.mxu0
      %v822 = vadd.f32 %v606, %v821
      %v823 = vpop.f32.mrf.mxu0
      %v824 = vpop.f32.mrf.mxu0
      %v825 = vadd.f32 %v609, %v824
      %v826 = vpop.f32.mrf.mxu0
      %827 = vmatprep.mubr.bf16.mxu0 0
      %828 = vmatmul.mubr.bf16.gmra.mxu0 %v654
      %v829 = vpop.f32.mrf.mxu0
      %v830 = vadd.f32 %v614, %v829
      %v831 = vpop.f32.mrf.mxu0
      %v832 = vpop.f32.mrf.mxu0
      %v833 = vadd.f32 %v617, %v832
      %v834 = vpop.f32.mrf.mxu0
      %835 = vdwg.mxu0
      %s836 = scalar_lea.vmem %s1, 4
      %v837 = vld [vmem:[%s836] sm:$0x3]
      %vm856 = vcmask 1046528
      %v857 = vrot.slane %v213, 1
      %v858 = vrot.slane %v214, 1
      %v859 = vsel %vm856, %v857, %v858
      %v860 = vrot.slane %v215, 1
      %v861 = vsel %vm856, %v858, %v860
      %v862 = vrot.slane %v216, 1
      %v863 = vsel %vm856, %v860, %v862
      %v864 = vrot.slane %v217, 1
      %v865 = vsel %vm856, %v862, %v864
      %v866 = vrot.slane %v218, 1
      %v867 = vsel %vm856, %v864, %v866
      %v868 = vrot.slane %v219, 1
      %v869 = vsel %vm856, %v866, %v868
      %v870 = vrot.slane %v220, 1
      %v871 = vsel %vm856, %v868, %v870
      %v872 = vrot.slane %v221, 1
      %v873 = vsel %vm856, %v870, %v872
      %v874 = vrot.slane %v222, 1
      %v875 = vsel %vm856, %v872, %v874
      %v876 = vrot.slane %v223, 1
      %v877 = vsel %vm856, %v874, %v876
      %v878 = vrot.slane %v224, 1
      %v879 = vsel %vm856, %v876, %v878
      %v880 = vrot.slane %v225, 1
      %v881 = vsel %vm856, %v878, %v880
      %v882 = vrot.slane %v226, 1
      %v883 = vsel %vm856, %v880, %v882
      %v884 = vrot.slane %v227, 1
      %v885 = vsel %vm856, %v882, %v884
      %v886 = vrot.slane %v228, 1
      %v887 = vsel %vm856, %v884, %v886
      %v888 = vrot.slane %v229, 1
      %v889 = vsel %vm856, %v886, %v888
      %v890 = vrot.slane %v230, 1
      %v891 = vsel %vm856, %v888, %v890
      %v893 = vsel %vm381, %v859, 0
      %v896 = vsel %vm381, %v861, 0
      %v899 = vsel %vm381, %v863, 0
      %v902 = vsel %vm381, %v865, 0
      %v905 = vsel %vm381, %v867, 0
      %v908 = vsel %vm381, %v869, 0
      %v911 = vsel %vm381, %v871, 0
      %v914 = vsel %vm381, %v873, 0
      %v917 = vsel %vm381, %v875, 0
      %v920 = vsel %vm381, %v877, 0
      %v923 = vsel %vm381, %v879, 0
      %v926 = vsel %vm381, %v881, 0
      %v929 = vsel %vm381, %v883, 0
      %v932 = vsel %vm381, %v885, 0
      %v935 = vsel %vm381, %v887, 0
      %v938 = vsel %vm381, %v889, 0
      %v941 = vsel %vm381, %v891, 0
      %v944 = vsel %vm381, %v890, 0
      %v947 = vand.u32 %v837, %v439
      %949 = vmatprep.subr.bf16.mxu0 0
      %950 = vmatpush1.bf16.msra.mxu0 0
      %951 = vmatprep.subr.bf16.mxu0 0
      %952 = vmatpush1.bf16.msra.mxu0 0
      %953 = vmatprep.subr.bf16.mxu0 0
      %954 = vmatpush1.bf16.msra.mxu0 0
      %955 = vmatprep.subr.bf16.mxu0 0
      %956 = vmatpush1.bf16.msra.mxu0 0
      %957 = vmatprep.subr.bf16.mxu0 0
      %958 = vmatpush1.bf16.msra.mxu0 0
      %959 = vmatprep.subr.bf16.mxu0 0
      %960 = vmatpush1.bf16.msra.mxu0 0
      %961 = vmatprep.subr.bf16.mxu0 0
      %962 = vmatpush1.bf16.msra.mxu0 0
      %963 = vmatprep.subr.bf16.mxu0 0
      %964 = vmatpush1.bf16.msra.mxu0 %v947
      %965 = vmatprep.subr.bf16.mxu0 0
      %966 = vmatpush2.bf16.msra.mxu0 0
      %967 = vmatprep.subr.bf16.mxu0 0
      %968 = vmatpush2.bf16.msra.mxu0 0
      %969 = vmatprep.subr.bf16.mxu0 0
      %970 = vmatpush2.bf16.msra.mxu0 0
      %971 = vmatprep.subr.bf16.mxu0 0
      %972 = vmatpush2.bf16.msra.mxu0 0
      %973 = vmatprep.subr.bf16.mxu0 0
      %974 = vmatpush2.bf16.msra.mxu0 0
      %975 = vmatprep.subr.bf16.mxu0 0
      %976 = vmatpush2.bf16.msra.mxu0 0
      %977 = vmatprep.subr.bf16.mxu0 0
      %978 = vmatpush2.bf16.msra.mxu0 0
      %979 = vmatprep.subr.bf16.mxu0 0
      %980 = vmatpush2.bf16.msra.mxu0 0
      %981 = vmatprep.mubr.bf16.mxu0 0
      %982 = vmatmul.mubr.bf16.gmra.mxu0 %v893
      %v983 = vpop.f32.mrf.mxu0
      %v984 = vadd.f32 0.0, %v983
      %v985 = vpop.f32.mrf.mxu0
      %v986 = vpop.f32.mrf.mxu0
      %v987 = vadd.f32 0.0, %v986
      %v988 = vpop.f32.mrf.mxu0
      %989 = vmatprep.mubr.bf16.mxu0 0
      %990 = vmatmul.mubr.bf16.gmra.mxu0 %v896
      %v991 = vpop.f32.mrf.mxu0
      %v992 = vadd.f32 0.0, %v991
      %v993 = vpop.f32.mrf.mxu0
      %v994 = vpop.f32.mrf.mxu0
      %v995 = vadd.f32 0.0, %v994
      %v996 = vpop.f32.mrf.mxu0
      %997 = vmatprep.mubr.bf16.mxu0 0
      %998 = vmatmul.mubr.bf16.gmra.mxu0 %v899
      %v999 = vpop.f32.mrf.mxu0
      %v1000 = vadd.f32 0.0, %v999
      %v1001 = vpop.f32.mrf.mxu0
      %v1002 = vpop.f32.mrf.mxu0
      %v1003 = vadd.f32 0.0, %v1002
      %v1004 = vpop.f32.mrf.mxu0
      %1005 = vmatprep.mubr.bf16.mxu0 0
      %1006 = vmatmul.mubr.bf16.gmra.mxu0 %v902
      %v1007 = vpop.f32.mrf.mxu0
      %v1008 = vadd.f32 0.0, %v1007
      %v1009 = vpop.f32.mrf.mxu0
      %v1010 = vpop.f32.mrf.mxu0
      %v1011 = vadd.f32 0.0, %v1010
      %v1012 = vpop.f32.mrf.mxu0
      %1013 = vmatprep.mubr.bf16.mxu0 0
      %1014 = vmatmul.mubr.bf16.gmra.mxu0 %v905
      %v1015 = vpop.f32.mrf.mxu0
      %v1016 = vadd.f32 0.0, %v1015
      %v1017 = vpop.f32.mrf.mxu0
      %v1018 = vpop.f32.mrf.mxu0
      %v1019 = vadd.f32 0.0, %v1018
      %v1020 = vpop.f32.mrf.mxu0
      %1021 = vmatprep.mubr.bf16.mxu0 0
      %1022 = vmatmul.mubr.bf16.gmra.mxu0 %v908
      %v1023 = vpop.f32.mrf.mxu0
      %v1024 = vadd.f32 0.0, %v1023
      %v1025 = vpop.f32.mrf.mxu0
      %v1026 = vpop.f32.mrf.mxu0
      %v1027 = vadd.f32 0.0, %v1026
      %v1028 = vpop.f32.mrf.mxu0
      %1029 = vmatprep.mubr.bf16.mxu0 0
      %1030 = vmatmul.mubr.bf16.gmra.mxu0 %v911
      %v1031 = vpop.f32.mrf.mxu0
      %v1032 = vadd.f32 0.0, %v1031
      %v1033 = vpop.f32.mrf.mxu0
      %v1034 = vpop.f32.mrf.mxu0
      %v1035 = vadd.f32 0.0, %v1034
      %v1036 = vpop.f32.mrf.mxu0
      %1037 = vmatprep.mubr.bf16.mxu0 0
      %1038 = vmatmul.mubr.bf16.gmra.mxu0 %v914
      %v1039 = vpop.f32.mrf.mxu0
      %v1040 = vadd.f32 0.0, %v1039
      %v1041 = vpop.f32.mrf.mxu0
      %v1042 = vpop.f32.mrf.mxu0
      %v1043 = vadd.f32 0.0, %v1042
      %v1044 = vpop.f32.mrf.mxu0
      %1045 = vmatprep.mubr.bf16.mxu0 0
      %1046 = vmatmul.mubr.bf16.gmra.mxu0 %v917
      %v1047 = vpop.f32.mrf.mxu0
      %v1048 = vadd.f32 0.0, %v1047
      %v1049 = vpop.f32.mrf.mxu0
      %v1050 = vpop.f32.mrf.mxu0
      %v1051 = vadd.f32 0.0, %v1050
      %v1052 = vpop.f32.mrf.mxu0
      %1053 = vmatprep.mubr.bf16.mxu0 0
      %1054 = vmatmul.mubr.bf16.gmra.mxu0 %v920
      %v1055 = vpop.f32.mrf.mxu0
      %v1056 = vadd.f32 0.0, %v1055
      %v1057 = vpop.f32.mrf.mxu0
      %v1058 = vpop.f32.mrf.mxu0
      %v1059 = vadd.f32 0.0, %v1058
      %v1060 = vpop.f32.mrf.mxu0
      %1061 = vmatprep.mubr.bf16.mxu0 0
      %1062 = vmatmul.mubr.bf16.gmra.mxu0 %v923
      %v1063 = vpop.f32.mrf.mxu0
      %v1064 = vadd.f32 0.0, %v1063
      %v1065 = vpop.f32.mrf.mxu0
      %v1066 = vpop.f32.mrf.mxu0
      %v1067 = vadd.f32 0.0, %v1066
      %v1068 = vpop.f32.mrf.mxu0
      %1069 = vmatprep.mubr.bf16.mxu0 0
      %1070 = vmatmul.mubr.bf16.gmra.mxu0 %v926
      %v1071 = vpop.f32.mrf.mxu0
      %v1072 = vadd.f32 0.0, %v1071
      %v1073 = vpop.f32.mrf.mxu0
      %v1074 = vpop.f32.mrf.mxu0
      %v1075 = vadd.f32 0.0, %v1074
      %v1076 = vpop.f32.mrf.mxu0
      %1077 = vmatprep.mubr.bf16.mxu0 0
      %1078 = vmatmul.mubr.bf16.gmra.mxu0 %v929
      %v1079 = vpop.f32.mrf.mxu0
      %v1080 = vadd.f32 0.0, %v1079
      %v1081 = vpop.f32.mrf.mxu0
      %v1082 = vpop.f32.mrf.mxu0
      %v1083 = vadd.f32 0.0, %v1082
      %v1084 = vpop.f32.mrf.mxu0
      %1085 = vmatprep.mubr.bf16.mxu0 0
      %1086 = vmatmul.mubr.bf16.gmra.mxu0 %v932
      %v1087 = vpop.f32.mrf.mxu0
      %v1088 = vadd.f32 0.0, %v1087
      %v1089 = vpop.f32.mrf.mxu0
      %v1090 = vpop.f32.mrf.mxu0
      %v1091 = vadd.f32 0.0, %v1090
      %v1092 = vpop.f32.mrf.mxu0
      %1093 = vmatprep.mubr.bf16.mxu0 0
      %1094 = vmatmul.mubr.bf16.gmra.mxu0 %v935
      %v1095 = vpop.f32.mrf.mxu0
      %v1096 = vadd.f32 0.0, %v1095
      %v1097 = vpop.f32.mrf.mxu0
      %v1098 = vpop.f32.mrf.mxu0
      %v1099 = vadd.f32 0.0, %v1098
      %v1100 = vpop.f32.mrf.mxu0
      %1101 = vmatprep.mubr.bf16.mxu0 0
      %1102 = vmatmul.mubr.bf16.gmra.mxu0 %v938
      %v1103 = vpop.f32.mrf.mxu0
      %v1104 = vadd.f32 0.0, %v1103
      %v1105 = vpop.f32.mrf.mxu0
      %v1106 = vpop.f32.mrf.mxu0
      %v1107 = vadd.f32 0.0, %v1106
      %v1108 = vpop.f32.mrf.mxu0
      %1109 = vmatprep.mubr.bf16.mxu0 0
      %1110 = vmatmul.mubr.bf16.gmra.mxu0 %v941
      %v1111 = vpop.f32.mrf.mxu0
      %v1112 = vadd.f32 0.0, %v1111
      %v1113 = vpop.f32.mrf.mxu0
      %v1114 = vpop.f32.mrf.mxu0
      %v1115 = vadd.f32 0.0, %v1114
      %v1116 = vpop.f32.mrf.mxu0
      %1117 = vmatprep.mubr.bf16.mxu0 0
      %1118 = vmatmul.mubr.bf16.gmra.mxu0 %v944
      %v1119 = vpop.f32.mrf.mxu0
      %v1120 = vadd.f32 0.0, %v1119
      %v1121 = vpop.f32.mrf.mxu0
      %v1122 = vpop.f32.mrf.mxu0
      %v1123 = vadd.f32 0.0, %v1122
      %v1124 = vpop.f32.mrf.mxu0
      %1125 = vdwg.mxu0
      %v1126 = vadd.f32 %v694, %v984
      %v1127 = vadd.f32 %v697, %v987
      %v1128 = vadd.f32 %v702, %v992
      %v1129 = vadd.f32 %v705, %v995
      %v1130 = vadd.f32 %v710, %v1000
      %v1131 = vadd.f32 %v713, %v1003
      %v1132 = vadd.f32 %v718, %v1008
      %v1133 = vadd.f32 %v721, %v1011
      %v1134 = vadd.f32 %v726, %v1016
      %v1135 = vadd.f32 %v729, %v1019
      %v1136 = vadd.f32 %v734, %v1024
      %v1137 = vadd.f32 %v737, %v1027
      %v1138 = vadd.f32 %v742, %v1032
      %v1139 = vadd.f32 %v745, %v1035
      %v1140 = vadd.f32 %v750, %v1040
      %v1141 = vadd.f32 %v753, %v1043
      %v1142 = vadd.f32 %v758, %v1048
      %v1143 = vadd.f32 %v761, %v1051
      %v1144 = vadd.f32 %v766, %v1056
      %v1145 = vadd.f32 %v769, %v1059
      %v1146 = vadd.f32 %v774, %v1064
      %v1147 = vadd.f32 %v777, %v1067
      %v1148 = vadd.f32 %v782, %v1072
      %v1149 = vadd.f32 %v785, %v1075
      %v1150 = vadd.f32 %v790, %v1080
      %v1151 = vadd.f32 %v793, %v1083
      %v1152 = vadd.f32 %v798, %v1088
      %v1153 = vadd.f32 %v801, %v1091
      %v1154 = vadd.f32 %v806, %v1096
      %v1155 = vadd.f32 %v809, %v1099
      %v1156 = vadd.f32 %v814, %v1104
      %v1157 = vadd.f32 %v817, %v1107
      %v1158 = vadd.f32 %v822, %v1112
      %v1159 = vadd.f32 %v825, %v1115
      %v1160 = vadd.f32 %v830, %v1120
      %v1161 = vadd.f32 %v833, %v1123
      %s1162 = scalar_lea.vmem %s1, 6
      %v1163 = vld [vmem:[%s1162] sm:$0x3]
      %v1165 = vrot.slane %v231, 1
      %v1166 = vsel %vm856, %v890, %v1165
      %v1168 = vsel %vm381, %v1166, 0
      %v1171 = vsel %vm381, %v1165, 0
      %v1174 = vand.u32 %v1163, %v439
      %1176 = vmatprep.subr.bf16.mxu0 0
      %1177 = vmatpush1.bf16.msra.mxu0 0
      %1178 = vmatprep.subr.bf16.mxu0 0
      %1179 = vmatpush1.bf16.msra.mxu0 0
      %1180 = vmatprep.subr.bf16.mxu0 0
      %1181 = vmatpush1.bf16.msra.mxu0 0
      %1182 = vmatprep.subr.bf16.mxu0 0
      %1183 = vmatpush1.bf16.msra.mxu0 0
      %1184 = vmatprep.subr.bf16.mxu0 0
      %1185 = vmatpush1.bf16.msra.mxu0 0
      %1186 = vmatprep.subr.bf16.mxu0 0
      %1187 = vmatpush1.bf16.msra.mxu0 0
      %1188 = vmatprep.subr.bf16.mxu0 0
      %1189 = vmatpush1.bf16.msra.mxu0 0
      %1190 = vmatprep.subr.bf16.mxu0 0
      %1191 = vmatpush1.bf16.msra.mxu0 %v1174
      %1192 = vmatprep.subr.bf16.mxu0 0
      %1193 = vmatpush2.bf16.msra.mxu0 0
      %1194 = vmatprep.subr.bf16.mxu0 0
      %1195 = vmatpush2.bf16.msra.mxu0 0
      %1196 = vmatprep.subr.bf16.mxu0 0
      %1197 = vmatpush2.bf16.msra.mxu0 0
      %1198 = vmatprep.subr.bf16.mxu0 0
      %1199 = vmatpush2.bf16.msra.mxu0 0
      %1200 = vmatprep.subr.bf16.mxu0 0
      %1201 = vmatpush2.bf16.msra.mxu0 0
      %1202 = vmatprep.subr.bf16.mxu0 0
      %1203 = vmatpush2.bf16.msra.mxu0 0
      %1204 = vmatprep.subr.bf16.mxu0 0
      %1205 = vmatpush2.bf16.msra.mxu0 0
      %1206 = vmatprep.subr.bf16.mxu0 0
      %1207 = vmatpush2.bf16.msra.mxu0 0
      %1208 = vmatprep.mubr.bf16.mxu0 0
      %1209 = vmatmul.mubr.bf16.gmra.mxu0 %v896
      %v1210 = vpop.f32.mrf.mxu0
      %v1211 = vadd.f32 0.0, %v1210
      %v1212 = vpop.f32.mrf.mxu0
      %v1213 = vpop.f32.mrf.mxu0
      %v1214 = vadd.f32 0.0, %v1213
      %v1215 = vpop.f32.mrf.mxu0
      %1216 = vmatprep.mubr.bf16.mxu0 0
      %1217 = vmatmul.mubr.bf16.gmra.mxu0 %v899
      %v1218 = vpop.f32.mrf.mxu0
      %v1219 = vadd.f32 0.0, %v1218
      %v1220 = vpop.f32.mrf.mxu0
      %v1221 = vpop.f32.mrf.mxu0
      %v1222 = vadd.f32 0.0, %v1221
      %v1223 = vpop.f32.mrf.mxu0
      %1224 = vmatprep.mubr.bf16.mxu0 0
      %1225 = vmatmul.mubr.bf16.gmra.mxu0 %v902
      %v1226 = vpop.f32.mrf.mxu0
      %v1227 = vadd.f32 0.0, %v1226
      %v1228 = vpop.f32.mrf.mxu0
      %v1229 = vpop.f32.mrf.mxu0
      %v1230 = vadd.f32 0.0, %v1229
      %v1231 = vpop.f32.mrf.mxu0
      %1232 = vmatprep.mubr.bf16.mxu0 0
      %1233 = vmatmul.mubr.bf16.gmra.mxu0 %v905
      %v1234 = vpop.f32.mrf.mxu0
      %v1235 = vadd.f32 0.0, %v1234
      %v1236 = vpop.f32.mrf.mxu0
      %v1237 = vpop.f32.mrf.mxu0
      %v1238 = vadd.f32 0.0, %v1237
      %v1239 = vpop.f32.mrf.mxu0
      %1240 = vmatprep.mubr.bf16.mxu0 0
      %1241 = vmatmul.mubr.bf16.gmra.mxu0 %v908
      %v1242 = vpop.f32.mrf.mxu0
      %v1243 = vadd.f32 0.0, %v1242
      %v1244 = vpop.f32.mrf.mxu0
      %v1245 = vpop.f32.mrf.mxu0
      %v1246 = vadd.f32 0.0, %v1245
      %v1247 = vpop.f32.mrf.mxu0
      %1248 = vmatprep.mubr.bf16.mxu0 0
      %1249 = vmatmul.mubr.bf16.gmra.mxu0 %v911
      %v1250 = vpop.f32.mrf.mxu0
      %v1251 = vadd.f32 0.0, %v1250
      %v1252 = vpop.f32.mrf.mxu0
      %v1253 = vpop.f32.mrf.mxu0
      %v1254 = vadd.f32 0.0, %v1253
      %v1255 = vpop.f32.mrf.mxu0
      %1256 = vmatprep.mubr.bf16.mxu0 0
      %1257 = vmatmul.mubr.bf16.gmra.mxu0 %v914
      %v1258 = vpop.f32.mrf.mxu0
      %v1259 = vadd.f32 0.0, %v1258
      %v1260 = vpop.f32.mrf.mxu0
      %v1261 = vpop.f32.mrf.mxu0
      %v1262 = vadd.f32 0.0, %v1261
      %v1263 = vpop.f32.mrf.mxu0
      %1264 = vmatprep.mubr.bf16.mxu0 0
      %1265 = vmatmul.mubr.bf16.gmra.mxu0 %v917
      %v1266 = vpop.f32.mrf.mxu0
      %v1267 = vadd.f32 0.0, %v1266
      %v1268 = vpop.f32.mrf.mxu0
      %v1269 = vpop.f32.mrf.mxu0
      %v1270 = vadd.f32 0.0, %v1269
      %v1271 = vpop.f32.mrf.mxu0
      %1272 = vmatprep.mubr.bf16.mxu0 0
      %1273 = vmatmul.mubr.bf16.gmra.mxu0 %v920
      %v1274 = vpop.f32.mrf.mxu0
      %v1275 = vadd.f32 0.0, %v1274
      %v1276 = vpop.f32.mrf.mxu0
      %v1277 = vpop.f32.mrf.mxu0
      %v1278 = vadd.f32 0.0, %v1277
      %v1279 = vpop.f32.mrf.mxu0
      %1280 = vmatprep.mubr.bf16.mxu0 0
      %1281 = vmatmul.mubr.bf16.gmra.mxu0 %v923
      %v1282 = vpop.f32.mrf.mxu0
      %v1283 = vadd.f32 0.0, %v1282
      %v1284 = vpop.f32.mrf.mxu0
      %v1285 = vpop.f32.mrf.mxu0
      %v1286 = vadd.f32 0.0, %v1285
      %v1287 = vpop.f32.mrf.mxu0
      %1288 = vmatprep.mubr.bf16.mxu0 0
      %1289 = vmatmul.mubr.bf16.gmra.mxu0 %v926
      %v1290 = vpop.f32.mrf.mxu0
      %v1291 = vadd.f32 0.0, %v1290
      %v1292 = vpop.f32.mrf.mxu0
      %v1293 = vpop.f32.mrf.mxu0
      %v1294 = vadd.f32 0.0, %v1293
      %v1295 = vpop.f32.mrf.mxu0
      %1296 = vmatprep.mubr.bf16.mxu0 0
      %1297 = vmatmul.mubr.bf16.gmra.mxu0 %v929
      %v1298 = vpop.f32.mrf.mxu0
      %v1299 = vadd.f32 0.0, %v1298
      %v1300 = vpop.f32.mrf.mxu0
      %v1301 = vpop.f32.mrf.mxu0
      %v1302 = vadd.f32 0.0, %v1301
      %v1303 = vpop.f32.mrf.mxu0
      %1304 = vmatprep.mubr.bf16.mxu0 0
      %1305 = vmatmul.mubr.bf16.gmra.mxu0 %v932
      %v1306 = vpop.f32.mrf.mxu0
      %v1307 = vadd.f32 0.0, %v1306
      %v1308 = vpop.f32.mrf.mxu0
      %v1309 = vpop.f32.mrf.mxu0
      %v1310 = vadd.f32 0.0, %v1309
      %v1311 = vpop.f32.mrf.mxu0
      %1312 = vmatprep.mubr.bf16.mxu0 0
      %1313 = vmatmul.mubr.bf16.gmra.mxu0 %v935
      %v1314 = vpop.f32.mrf.mxu0
      %v1315 = vadd.f32 0.0, %v1314
      %v1316 = vpop.f32.mrf.mxu0
      %v1317 = vpop.f32.mrf.mxu0
      %v1318 = vadd.f32 0.0, %v1317
      %v1319 = vpop.f32.mrf.mxu0
      %1320 = vmatprep.mubr.bf16.mxu0 0
      %1321 = vmatmul.mubr.bf16.gmra.mxu0 %v938
      %v1322 = vpop.f32.mrf.mxu0
      %v1323 = vadd.f32 0.0, %v1322
      %v1324 = vpop.f32.mrf.mxu0
      %v1325 = vpop.f32.mrf.mxu0
      %v1326 = vadd.f32 0.0, %v1325
      %v1327 = vpop.f32.mrf.mxu0
      %1328 = vmatprep.mubr.bf16.mxu0 0
      %1329 = vmatmul.mubr.bf16.gmra.mxu0 %v941
      %v1330 = vpop.f32.mrf.mxu0
      %v1331 = vadd.f32 0.0, %v1330
      %v1332 = vpop.f32.mrf.mxu0
      %v1333 = vpop.f32.mrf.mxu0
      %v1334 = vadd.f32 0.0, %v1333
      %v1335 = vpop.f32.mrf.mxu0
      %1336 = vmatprep.mubr.bf16.mxu0 0
      %1337 = vmatmul.mubr.bf16.gmra.mxu0 %v1168
      %v1338 = vpop.f32.mrf.mxu0
      %v1339 = vadd.f32 0.0, %v1338
      %v1340 = vpop.f32.mrf.mxu0
      %v1341 = vpop.f32.mrf.mxu0
      %v1342 = vadd.f32 0.0, %v1341
      %v1343 = vpop.f32.mrf.mxu0
      %1344 = vmatprep.mubr.bf16.mxu0 0
      %1345 = vmatmul.mubr.bf16.gmra.mxu0 %v1171
      %v1346 = vpop.f32.mrf.mxu0
      %v1347 = vadd.f32 0.0, %v1346
      %v1348 = vpop.f32.mrf.mxu0
      %v1349 = vpop.f32.mrf.mxu0
      %v1350 = vadd.f32 0.0, %v1349
      %v1351 = vpop.f32.mrf.mxu0
      %1352 = vdwg.mxu0
      %v1353 = vadd.f32 %v1126, %v1211
      %v1354 = vadd.f32 %v1127, %v1214
      %v1355 = vadd.f32 %v1128, %v1219
      %v1356 = vadd.f32 %v1129, %v1222
      %v1357 = vadd.f32 %v1130, %v1227
      %v1358 = vadd.f32 %v1131, %v1230
      %v1359 = vadd.f32 %v1132, %v1235
      %v1360 = vadd.f32 %v1133, %v1238
      %v1361 = vadd.f32 %v1134, %v1243
      %v1362 = vadd.f32 %v1135, %v1246
      %v1363 = vadd.f32 %v1136, %v1251
      %v1364 = vadd.f32 %v1137, %v1254
      %v1365 = vadd.f32 %v1138, %v1259
      %v1366 = vadd.f32 %v1139, %v1262
      %v1367 = vadd.f32 %v1140, %v1267
      %v1368 = vadd.f32 %v1141, %v1270
      %v1369 = vadd.f32 %v1142, %v1275
      %v1370 = vadd.f32 %v1143, %v1278
      %v1371 = vadd.f32 %v1144, %v1283
      %v1372 = vadd.f32 %v1145, %v1286
      %v1373 = vadd.f32 %v1146, %v1291
      %v1374 = vadd.f32 %v1147, %v1294
      %v1375 = vadd.f32 %v1148, %v1299
      %v1376 = vadd.f32 %v1149, %v1302
      %v1377 = vadd.f32 %v1150, %v1307
      %v1378 = vadd.f32 %v1151, %v1310
      %v1379 = vadd.f32 %v1152, %v1315
      %v1380 = vadd.f32 %v1153, %v1318
      %v1381 = vadd.f32 %v1154, %v1323
      %v1382 = vadd.f32 %v1155, %v1326
      %v1383 = vadd.f32 %v1156, %v1331
      %v1384 = vadd.f32 %v1157, %v1334
      %v1385 = vadd.f32 %v1158, %v1339
      %v1386 = vadd.f32 %v1159, %v1342
      %v1387 = vadd.f32 %v1160, %v1347
      %v1388 = vadd.f32 %v1161, %v1350
      %s1389 = scalar_lea.vmem %s1, 8
      %v1390 = vld [vmem:[%s1389] sm:$0x3]
      %vm1391 = vsmask.f32 6400
      %v1392 = vrot.slane %v250, 1
      %v1393 = vrot.slane %v246, 2
      %v1394 = vor.u32 %v1392, %v1393
      %v1395 = vrot.slane %v258, 1
      %v1396 = vrot.slane %v254, 2
      %v1397 = vor.u32 %v1395, %v1396
      %v1398 = vsel %vm1391, %v1394, %v1397
      %v1399 = vrot.slane %v266, 1
      %v1400 = vrot.slane %v262, 2
      %v1401 = vor.u32 %v1399, %v1400
      %v1402 = vsel %vm1391, %v1397, %v1401
      %v1403 = vrot.slane %v274, 1
      %v1404 = vrot.slane %v270, 2
      %v1405 = vor.u32 %v1403, %v1404
      %v1406 = vsel %vm1391, %v1401, %v1405
      %v1407 = vrot.slane %v282, 1
      %v1408 = vrot.slane %v278, 2
      %v1409 = vor.u32 %v1407, %v1408
      %v1410 = vsel %vm1391, %v1405, %v1409
      %v1411 = vrot.slane %v290, 1
      %v1412 = vrot.slane %v286, 2
      %v1413 = vor.u32 %v1411, %v1412
      %v1414 = vsel %vm1391, %v1409, %v1413
      %v1415 = vrot.slane %v298, 1
      %v1416 = vrot.slane %v294, 2
      %v1417 = vor.u32 %v1415, %v1416
      %v1418 = vsel %vm1391, %v1413, %v1417
      %v1419 = vrot.slane %v306, 1
      %v1420 = vrot.slane %v302, 2
      %v1421 = vor.u32 %v1419, %v1420
      %v1422 = vsel %vm1391, %v1417, %v1421
      %v1423 = vrot.slane %v314, 1
      %v1424 = vrot.slane %v310, 2
      %v1425 = vor.u32 %v1423, %v1424
      %v1426 = vsel %vm1391, %v1421, %v1425
      %v1427 = vrot.slane %v322, 1
      %v1428 = vrot.slane %v318, 2
      %v1429 = vor.u32 %v1427, %v1428
      %v1430 = vsel %vm1391, %v1425, %v1429
      %v1431 = vrot.slane %v330, 1
      %v1432 = vrot.slane %v326, 2
      %v1433 = vor.u32 %v1431, %v1432
      %v1434 = vsel %vm1391, %v1429, %v1433
      %v1435 = vrot.slane %v338, 1
      %v1436 = vrot.slane %v334, 2
      %v1437 = vor.u32 %v1435, %v1436
      %v1438 = vsel %vm1391, %v1433, %v1437
      %v1439 = vrot.slane %v346, 1
      %v1440 = vrot.slane %v342, 2
      %v1441 = vor.u32 %v1439, %v1440
      %v1442 = vsel %vm1391, %v1437, %v1441
      %v1443 = vrot.slane %v354, 1
      %v1444 = vrot.slane %v350, 2
      %v1445 = vor.u32 %v1443, %v1444
      %v1446 = vsel %vm1391, %v1441, %v1445
      %v1447 = vrot.slane %v362, 1
      %v1448 = vrot.slane %v358, 2
      %v1449 = vor.u32 %v1447, %v1448
      %v1450 = vsel %vm1391, %v1445, %v1449
      %v1451 = vrot.slane %v370, 1
      %v1452 = vrot.slane %v366, 2
      %v1453 = vor.u32 %v1451, %v1452
      %v1454 = vsel %vm1391, %v1449, %v1453
      %v1455 = vrot.slane %v378, 1
      %v1456 = vrot.slane %v374, 2
      %v1457 = vor.u32 %v1455, %v1456
      %v1458 = vsel %vm1391, %v1453, %v1457
      %v1460 = vshrl.u32 %v231, 16
      %v1462 = vrot.slane %v1460, 1
      %v1463 = vshll.u32 %v231, 16
      %v1465 = vrot.slane %v1463, 2
      %v1466 = vor.u32 %v1462, %v1465
      %v1467 = vsel %vm1391, %v1457, %v1466
      %v1469 = vshll.u32 %v232, 16
      %v1471 = vrot.slane %v1469, 2
      %v1472 = vsel %vm1391, %v1466, %v1471
      %v1474 = vsel %vm381, %v1398, 0
      %v1477 = vsel %vm381, %v1402, 0
      %v1480 = vsel %vm381, %v1406, 0
      %v1483 = vsel %vm381, %v1410, 0
      %v1486 = vsel %vm381, %v1414, 0
      %v1489 = vsel %vm381, %v1418, 0
      %v1492 = vsel %vm381, %v1422, 0
      %v1495 = vsel %vm381, %v1426, 0
      %v1498 = vsel %vm381, %v1430, 0
      %v1501 = vsel %vm381, %v1434, 0
      %v1504 = vsel %vm381, %v1438, 0
      %v1507 = vsel %vm381, %v1442, 0
      %v1510 = vsel %vm381, %v1446, 0
      %v1513 = vsel %vm381, %v1450, 0
      %v1516 = vsel %vm381, %v1454, 0
      %v1519 = vsel %vm381, %v1458, 0
      %v1522 = vsel %vm381, %v1467, 0
      %v1525 = vsel %vm381, %v1472, 0
      %v1528 = vand.u32 %v1390, %v439
      %1530 = vmatprep.subr.bf16.mxu0 0
      %1531 = vmatpush1.bf16.msra.mxu0 0
      %1532 = vmatprep.subr.bf16.mxu0 0
      %1533 = vmatpush1.bf16.msra.mxu0 0
      %1534 = vmatprep.subr.bf16.mxu0 0
      %1535 = vmatpush1.bf16.msra.mxu0 0
      %1536 = vmatprep.subr.bf16.mxu0 0
      %1537 = vmatpush1.bf16.msra.mxu0 0
      %1538 = vmatprep.subr.bf16.mxu0 0
      %1539 = vmatpush1.bf16.msra.mxu0 0
      %1540 = vmatprep.subr.bf16.mxu0 0
      %1541 = vmatpush1.bf16.msra.mxu0 0
      %1542 = vmatprep.subr.bf16.mxu0 0
      %1543 = vmatpush1.bf16.msra.mxu0 0
      %1544 = vmatprep.subr.bf16.mxu0 0
      %1545 = vmatpush1.bf16.msra.mxu0 %v1528
      %1546 = vmatprep.subr.bf16.mxu0 0
      %1547 = vmatpush2.bf16.msra.mxu0 0
      %1548 = vmatprep.subr.bf16.mxu0 0
      %1549 = vmatpush2.bf16.msra.mxu0 0
      %1550 = vmatprep.subr.bf16.mxu0 0
      %1551 = vmatpush2.bf16.msra.mxu0 0
      %1552 = vmatprep.subr.bf16.mxu0 0
      %1553 = vmatpush2.bf16.msra.mxu0 0
      %1554 = vmatprep.subr.bf16.mxu0 0
      %1555 = vmatpush2.bf16.msra.mxu0 0
      %1556 = vmatprep.subr.bf16.mxu0 0
      %1557 = vmatpush2.bf16.msra.mxu0 0
      %1558 = vmatprep.subr.bf16.mxu0 0
      %1559 = vmatpush2.bf16.msra.mxu0 0
      %1560 = vmatprep.subr.bf16.mxu0 0
      %1561 = vmatpush2.bf16.msra.mxu0 0
      %1562 = vmatprep.mubr.bf16.mxu0 0
      %1563 = vmatmul.mubr.bf16.gmra.mxu0 %v1474
      %v1564 = vpop.f32.mrf.mxu0
      %v1565 = vadd.f32 0.0, %v1564
      %v1566 = vpop.f32.mrf.mxu0
      %v1567 = vpop.f32.mrf.mxu0
      %v1568 = vadd.f32 0.0, %v1567
      %v1569 = vpop.f32.mrf.mxu0
      %1570 = vmatprep.mubr.bf16.mxu0 0
      %1571 = vmatmul.mubr.bf16.gmra.mxu0 %v1477
      %v1572 = vpop.f32.mrf.mxu0
      %v1573 = vadd.f32 0.0, %v1572
      %v1574 = vpop.f32.mrf.mxu0
      %v1575 = vpop.f32.mrf.mxu0
      %v1576 = vadd.f32 0.0, %v1575
      %v1577 = vpop.f32.mrf.mxu0
      %1578 = vmatprep.mubr.bf16.mxu0 0
      %1579 = vmatmul.mubr.bf16.gmra.mxu0 %v1480
      %v1580 = vpop.f32.mrf.mxu0
      %v1581 = vadd.f32 0.0, %v1580
      %v1582 = vpop.f32.mrf.mxu0
      %v1583 = vpop.f32.mrf.mxu0
      %v1584 = vadd.f32 0.0, %v1583
      %v1585 = vpop.f32.mrf.mxu0
      %1586 = vmatprep.mubr.bf16.mxu0 0
      %1587 = vmatmul.mubr.bf16.gmra.mxu0 %v1483
      %v1588 = vpop.f32.mrf.mxu0
      %v1589 = vadd.f32 0.0, %v1588
      %v1590 = vpop.f32.mrf.mxu0
      %v1591 = vpop.f32.mrf.mxu0
      %v1592 = vadd.f32 0.0, %v1591
      %v1593 = vpop.f32.mrf.mxu0
      %1594 = vmatprep.mubr.bf16.mxu0 0
      %1595 = vmatmul.mubr.bf16.gmra.mxu0 %v1486
      %v1596 = vpop.f32.mrf.mxu0
      %v1597 = vadd.f32 0.0, %v1596
      %v1598 = vpop.f32.mrf.mxu0
      %v1599 = vpop.f32.mrf.mxu0
      %v1600 = vadd.f32 0.0, %v1599
      %v1601 = vpop.f32.mrf.mxu0
      %1602 = vmatprep.mubr.bf16.mxu0 0
      %1603 = vmatmul.mubr.bf16.gmra.mxu0 %v1489
      %v1604 = vpop.f32.mrf.mxu0
      %v1605 = vadd.f32 0.0, %v1604
      %v1606 = vpop.f32.mrf.mxu0
      %v1607 = vpop.f32.mrf.mxu0
      %v1608 = vadd.f32 0.0, %v1607
      %v1609 = vpop.f32.mrf.mxu0
      %1610 = vmatprep.mubr.bf16.mxu0 0
      %1611 = vmatmul.mubr.bf16.gmra.mxu0 %v1492
      %v1612 = vpop.f32.mrf.mxu0
      %v1613 = vadd.f32 0.0, %v1612
      %v1614 = vpop.f32.mrf.mxu0
      %v1615 = vpop.f32.mrf.mxu0
      %v1616 = vadd.f32 0.0, %v1615
      %v1617 = vpop.f32.mrf.mxu0
      %1618 = vmatprep.mubr.bf16.mxu0 0
      %1619 = vmatmul.mubr.bf16.gmra.mxu0 %v1495
      %v1620 = vpop.f32.mrf.mxu0
      %v1621 = vadd.f32 0.0, %v1620
      %v1622 = vpop.f32.mrf.mxu0
      %v1623 = vpop.f32.mrf.mxu0
      %v1624 = vadd.f32 0.0, %v1623
      %v1625 = vpop.f32.mrf.mxu0
      %1626 = vmatprep.mubr.bf16.mxu0 0
      %1627 = vmatmul.mubr.bf16.gmra.mxu0 %v1498
      %v1628 = vpop.f32.mrf.mxu0
      %v1629 = vadd.f32 0.0, %v1628
      %v1630 = vpop.f32.mrf.mxu0
      %v1631 = vpop.f32.mrf.mxu0
      %v1632 = vadd.f32 0.0, %v1631
      %v1633 = vpop.f32.mrf.mxu0
      %1634 = vmatprep.mubr.bf16.mxu0 0
      %1635 = vmatmul.mubr.bf16.gmra.mxu0 %v1501
      %v1636 = vpop.f32.mrf.mxu0
      %v1637 = vadd.f32 0.0, %v1636
      %v1638 = vpop.f32.mrf.mxu0
      %v1639 = vpop.f32.mrf.mxu0
      %v1640 = vadd.f32 0.0, %v1639
      %v1641 = vpop.f32.mrf.mxu0
      %1642 = vmatprep.mubr.bf16.mxu0 0
      %1643 = vmatmul.mubr.bf16.gmra.mxu0 %v1504
      %v1644 = vpop.f32.mrf.mxu0
      %v1645 = vadd.f32 0.0, %v1644
      %v1646 = vpop.f32.mrf.mxu0
      %v1647 = vpop.f32.mrf.mxu0
      %v1648 = vadd.f32 0.0, %v1647
      %v1649 = vpop.f32.mrf.mxu0
      %1650 = vmatprep.mubr.bf16.mxu0 0
      %1651 = vmatmul.mubr.bf16.gmra.mxu0 %v1507
      %v1652 = vpop.f32.mrf.mxu0
      %v1653 = vadd.f32 0.0, %v1652
      %v1654 = vpop.f32.mrf.mxu0
      %v1655 = vpop.f32.mrf.mxu0
      %v1656 = vadd.f32 0.0, %v1655
      %v1657 = vpop.f32.mrf.mxu0
      %1658 = vmatprep.mubr.bf16.mxu0 0
      %1659 = vmatmul.mubr.bf16.gmra.mxu0 %v1510
      %v1660 = vpop.f32.mrf.mxu0
      %v1661 = vadd.f32 0.0, %v1660
      %v1662 = vpop.f32.mrf.mxu0
      %v1663 = vpop.f32.mrf.mxu0
      %v1664 = vadd.f32 0.0, %v1663
      %v1665 = vpop.f32.mrf.mxu0
      %1666 = vmatprep.mubr.bf16.mxu0 0
      %1667 = vmatmul.mubr.bf16.gmra.mxu0 %v1513
      %v1668 = vpop.f32.mrf.mxu0
      %v1669 = vadd.f32 0.0, %v1668
      %v1670 = vpop.f32.mrf.mxu0
      %v1671 = vpop.f32.mrf.mxu0
      %v1672 = vadd.f32 0.0, %v1671
      %v1673 = vpop.f32.mrf.mxu0
      %1674 = vmatprep.mubr.bf16.mxu0 0
      %1675 = vmatmul.mubr.bf16.gmra.mxu0 %v1516
      %v1676 = vpop.f32.mrf.mxu0
      %v1677 = vadd.f32 0.0, %v1676
      %v1678 = vpop.f32.mrf.mxu0
      %v1679 = vpop.f32.mrf.mxu0
      %v1680 = vadd.f32 0.0, %v1679
      %v1681 = vpop.f32.mrf.mxu0
      %1682 = vmatprep.mubr.bf16.mxu0 0
      %1683 = vmatmul.mubr.bf16.gmra.mxu0 %v1519
      %v1684 = vpop.f32.mrf.mxu0
      %v1685 = vadd.f32 0.0, %v1684
      %v1686 = vpop.f32.mrf.mxu0
      %v1687 = vpop.f32.mrf.mxu0
      %v1688 = vadd.f32 0.0, %v1687
      %v1689 = vpop.f32.mrf.mxu0
      %1690 = vmatprep.mubr.bf16.mxu0 0
      %1691 = vmatmul.mubr.bf16.gmra.mxu0 %v1522
      %v1692 = vpop.f32.mrf.mxu0
      %v1693 = vadd.f32 0.0, %v1692
      %v1694 = vpop.f32.mrf.mxu0
      %v1695 = vpop.f32.mrf.mxu0
      %v1696 = vadd.f32 0.0, %v1695
      %v1697 = vpop.f32.mrf.mxu0
      %1698 = vmatprep.mubr.bf16.mxu0 0
      %1699 = vmatmul.mubr.bf16.gmra.mxu0 %v1525
      %v1700 = vpop.f32.mrf.mxu0
      %v1701 = vadd.f32 0.0, %v1700
      %v1702 = vpop.f32.mrf.mxu0
      %v1703 = vpop.f32.mrf.mxu0
      %v1704 = vadd.f32 0.0, %v1703
      %v1705 = vpop.f32.mrf.mxu0
      %1706 = vdwg.mxu0
      %v1707 = vadd.f32 %v1353, %v1565
      %v1708 = vadd.f32 %v1354, %v1568
      %v1709 = vadd.f32 %v1355, %v1573
      %v1710 = vadd.f32 %v1356, %v1576
      %v1711 = vadd.f32 %v1357, %v1581
      %v1712 = vadd.f32 %v1358, %v1584
      %v1713 = vadd.f32 %v1359, %v1589
      %v1714 = vadd.f32 %v1360, %v1592
      %v1715 = vadd.f32 %v1361, %v1597
      %v1716 = vadd.f32 %v1362, %v1600
      %v1717 = vadd.f32 %v1363, %v1605
      %v1718 = vadd.f32 %v1364, %v1608
      %v1719 = vadd.f32 %v1365, %v1613
      %v1720 = vadd.f32 %v1366, %v1616
      %v1721 = vadd.f32 %v1367, %v1621
      %v1722 = vadd.f32 %v1368, %v1624
      %v1723 = vadd.f32 %v1369, %v1629
      %v1724 = vadd.f32 %v1370, %v1632
      %v1725 = vadd.f32 %v1371, %v1637
      %v1726 = vadd.f32 %v1372, %v1640
      %v1727 = vadd.f32 %v1373, %v1645
      %v1728 = vadd.f32 %v1374, %v1648
      %v1729 = vadd.f32 %v1375, %v1653
      %v1730 = vadd.f32 %v1376, %v1656
      %v1731 = vadd.f32 %v1377, %v1661
      %v1732 = vadd.f32 %v1378, %v1664
      %v1733 = vadd.f32 %v1379, %v1669
      %v1734 = vadd.f32 %v1380, %v1672
      %v1735 = vadd.f32 %v1381, %v1677
      %v1736 = vadd.f32 %v1382, %v1680
      %v1737 = vadd.f32 %v1383, %v1685
      %v1738 = vadd.f32 %v1384, %v1688
      %v1739 = vadd.f32 %v1385, %v1693
      %v1740 = vadd.f32 %v1386, %v1696
      %v1741 = vadd.f32 %v1387, %v1701
      %v1742 = vadd.f32 %v1388, %v1704
      %s1743 = scalar_lea.vmem %s1, 10
      %v1744 = vld [vmem:[%s1743] sm:$0x3]
      %vm1746 = vcmask 1045504
      %v1747 = vrot.slane %v214, 2
      %v1748 = vrot.slane %v215, 2
      %v1749 = vsel %vm1746, %v1747, %v1748
      %v1750 = vrot.slane %v216, 2
      %v1751 = vsel %vm1746, %v1748, %v1750
      %v1752 = vrot.slane %v217, 2
      %v1753 = vsel %vm1746, %v1750, %v1752
      %v1754 = vrot.slane %v218, 2
      %v1755 = vsel %vm1746, %v1752, %v1754
      %v1756 = vrot.slane %v219, 2
      %v1757 = vsel %vm1746, %v1754, %v1756
      %v1758 = vrot.slane %v220, 2
      %v1759 = vsel %vm1746, %v1756, %v1758
      %v1760 = vrot.slane %v221, 2
      %v1761 = vsel %vm1746, %v1758, %v1760
      %v1762 = vrot.slane %v222, 2
      %v1763 = vsel %vm1746, %v1760, %v1762
      %v1764 = vrot.slane %v223, 2
      %v1765 = vsel %vm1746, %v1762, %v1764
      %v1766 = vrot.slane %v224, 2
      %v1767 = vsel %vm1746, %v1764, %v1766
      %v1768 = vrot.slane %v225, 2
      %v1769 = vsel %vm1746, %v1766, %v1768
      %v1770 = vrot.slane %v226, 2
      %v1771 = vsel %vm1746, %v1768, %v1770
      %v1772 = vrot.slane %v227, 2
      %v1773 = vsel %vm1746, %v1770, %v1772
      %v1774 = vrot.slane %v228, 2
      %v1775 = vsel %vm1746, %v1772, %v1774
      %v1776 = vrot.slane %v229, 2
      %v1777 = vsel %vm1746, %v1774, %v1776
      %v1778 = vrot.slane %v230, 2
      %v1779 = vsel %vm1746, %v1776, %v1778
      %v1780 = vrot.slane %v231, 2
      %v1781 = vsel %vm1746, %v1778, %v1780
      %v1782 = vrot.slane %v232, 2
      %v1783 = vsel %vm1746, %v1780, %v1782
      %v1785 = vsel %vm381, %v1749, 0
      %v1788 = vsel %vm381, %v1751, 0
      %v1791 = vsel %vm381, %v1753, 0
      %v1794 = vsel %vm381, %v1755, 0
      %v1797 = vsel %vm381, %v1757, 0
      %v1800 = vsel %vm381, %v1759, 0
      %v1803 = vsel %vm381, %v1761, 0
      %v1806 = vsel %vm381, %v1763, 0
      %v1809 = vsel %vm381, %v1765, 0
      %v1812 = vsel %vm381, %v1767, 0
      %v1815 = vsel %vm381, %v1769, 0
      %v1818 = vsel %vm381, %v1771, 0
      %v1821 = vsel %vm381, %v1773, 0
      %v1824 = vsel %vm381, %v1775, 0
      %v1827 = vsel %vm381, %v1777, 0
      %v1830 = vsel %vm381, %v1779, 0
      %v1833 = vsel %vm381, %v1781, 0
      %v1836 = vsel %vm381, %v1783, 0
      %v1839 = vand.u32 %v1744, %v439
      %1841 = vmatprep.subr.bf16.mxu0 0
      %1842 = vmatpush1.bf16.msra.mxu0 0
      %1843 = vmatprep.subr.bf16.mxu0 0
      %1844 = vmatpush1.bf16.msra.mxu0 0
      %1845 = vmatprep.subr.bf16.mxu0 0
      %1846 = vmatpush1.bf16.msra.mxu0 0
      %1847 = vmatprep.subr.bf16.mxu0 0
      %1848 = vmatpush1.bf16.msra.mxu0 0
      %1849 = vmatprep.subr.bf16.mxu0 0
      %1850 = vmatpush1.bf16.msra.mxu0 0
      %1851 = vmatprep.subr.bf16.mxu0 0
      %1852 = vmatpush1.bf16.msra.mxu0 0
      %1853 = vmatprep.subr.bf16.mxu0 0
      %1854 = vmatpush1.bf16.msra.mxu0 0
      %1855 = vmatprep.subr.bf16.mxu0 0
      %1856 = vmatpush1.bf16.msra.mxu0 %v1839
      %1857 = vmatprep.subr.bf16.mxu0 0
      %1858 = vmatpush2.bf16.msra.mxu0 0
      %1859 = vmatprep.subr.bf16.mxu0 0
      %1860 = vmatpush2.bf16.msra.mxu0 0
      %1861 = vmatprep.subr.bf16.mxu0 0
      %1862 = vmatpush2.bf16.msra.mxu0 0
      %1863 = vmatprep.subr.bf16.mxu0 0
      %1864 = vmatpush2.bf16.msra.mxu0 0
      %1865 = vmatprep.subr.bf16.mxu0 0
      %1866 = vmatpush2.bf16.msra.mxu0 0
      %1867 = vmatprep.subr.bf16.mxu0 0
      %1868 = vmatpush2.bf16.msra.mxu0 0
      %1869 = vmatprep.subr.bf16.mxu0 0
      %1870 = vmatpush2.bf16.msra.mxu0 0
      %1871 = vmatprep.subr.bf16.mxu0 0
      %1872 = vmatpush2.bf16.msra.mxu0 0
      %1873 = vmatprep.mubr.bf16.mxu0 0
      %1874 = vmatmul.mubr.bf16.gmra.mxu0 %v1785
      %v1875 = vpop.f32.mrf.mxu0
      %v1876 = vadd.f32 0.0, %v1875
      %v1877 = vpop.f32.mrf.mxu0
      %v1878 = vpop.f32.mrf.mxu0
      %v1879 = vadd.f32 0.0, %v1878
      %v1880 = vpop.f32.mrf.mxu0
      %1881 = vmatprep.mubr.bf16.mxu0 0
      %1882 = vmatmul.mubr.bf16.gmra.mxu0 %v1788
      %v1883 = vpop.f32.mrf.mxu0
      %v1884 = vadd.f32 0.0, %v1883
      %v1885 = vpop.f32.mrf.mxu0
      %v1886 = vpop.f32.mrf.mxu0
      %v1887 = vadd.f32 0.0, %v1886
      %v1888 = vpop.f32.mrf.mxu0
      %1889 = vmatprep.mubr.bf16.mxu0 0
      %1890 = vmatmul.mubr.bf16.gmra.mxu0 %v1791
      %v1891 = vpop.f32.mrf.mxu0
      %v1892 = vadd.f32 0.0, %v1891
      %v1893 = vpop.f32.mrf.mxu0
      %v1894 = vpop.f32.mrf.mxu0
      %v1895 = vadd.f32 0.0, %v1894
      %v1896 = vpop.f32.mrf.mxu0
      %1897 = vmatprep.mubr.bf16.mxu0 0
      %1898 = vmatmul.mubr.bf16.gmra.mxu0 %v1794
      %v1899 = vpop.f32.mrf.mxu0
      %v1900 = vadd.f32 0.0, %v1899
      %v1901 = vpop.f32.mrf.mxu0
      %v1902 = vpop.f32.mrf.mxu0
      %v1903 = vadd.f32 0.0, %v1902
      %v1904 = vpop.f32.mrf.mxu0
      %1905 = vmatprep.mubr.bf16.mxu0 0
      %1906 = vmatmul.mubr.bf16.gmra.mxu0 %v1797
      %v1907 = vpop.f32.mrf.mxu0
      %v1908 = vadd.f32 0.0, %v1907
      %v1909 = vpop.f32.mrf.mxu0
      %v1910 = vpop.f32.mrf.mxu0
      %v1911 = vadd.f32 0.0, %v1910
      %v1912 = vpop.f32.mrf.mxu0
      %1913 = vmatprep.mubr.bf16.mxu0 0
      %1914 = vmatmul.mubr.bf16.gmra.mxu0 %v1800
      %v1915 = vpop.f32.mrf.mxu0
      %v1916 = vadd.f32 0.0, %v1915
      %v1917 = vpop.f32.mrf.mxu0
      %v1918 = vpop.f32.mrf.mxu0
      %v1919 = vadd.f32 0.0, %v1918
      %v1920 = vpop.f32.mrf.mxu0
      %1921 = vmatprep.mubr.bf16.mxu0 0
      %1922 = vmatmul.mubr.bf16.gmra.mxu0 %v1803
      %v1923 = vpop.f32.mrf.mxu0
      %v1924 = vadd.f32 0.0, %v1923
      %v1925 = vpop.f32.mrf.mxu0
      %v1926 = vpop.f32.mrf.mxu0
      %v1927 = vadd.f32 0.0, %v1926
      %v1928 = vpop.f32.mrf.mxu0
      %1929 = vmatprep.mubr.bf16.mxu0 0
      %1930 = vmatmul.mubr.bf16.gmra.mxu0 %v1806
      %v1931 = vpop.f32.mrf.mxu0
      %v1932 = vadd.f32 0.0, %v1931
      %v1933 = vpop.f32.mrf.mxu0
      %v1934 = vpop.f32.mrf.mxu0
      %v1935 = vadd.f32 0.0, %v1934
      %v1936 = vpop.f32.mrf.mxu0
      %1937 = vmatprep.mubr.bf16.mxu0 0
      %1938 = vmatmul.mubr.bf16.gmra.mxu0 %v1809
      %v1939 = vpop.f32.mrf.mxu0
      %v1940 = vadd.f32 0.0, %v1939
      %v1941 = vpop.f32.mrf.mxu0
      %v1942 = vpop.f32.mrf.mxu0
      %v1943 = vadd.f32 0.0, %v1942
      %v1944 = vpop.f32.mrf.mxu0
      %1945 = vmatprep.mubr.bf16.mxu0 0
      %1946 = vmatmul.mubr.bf16.gmra.mxu0 %v1812
      %v1947 = vpop.f32.mrf.mxu0
      %v1948 = vadd.f32 0.0, %v1947
      %v1949 = vpop.f32.mrf.mxu0
      %v1950 = vpop.f32.mrf.mxu0
      %v1951 = vadd.f32 0.0, %v1950
      %v1952 = vpop.f32.mrf.mxu0
      %1953 = vmatprep.mubr.bf16.mxu0 0
      %1954 = vmatmul.mubr.bf16.gmra.mxu0 %v1815
      %v1955 = vpop.f32.mrf.mxu0
      %v1956 = vadd.f32 0.0, %v1955
      %v1957 = vpop.f32.mrf.mxu0
      %v1958 = vpop.f32.mrf.mxu0
      %v1959 = vadd.f32 0.0, %v1958
      %v1960 = vpop.f32.mrf.mxu0
      %1961 = vmatprep.mubr.bf16.mxu0 0
      %1962 = vmatmul.mubr.bf16.gmra.mxu0 %v1818
      %v1963 = vpop.f32.mrf.mxu0
      %v1964 = vadd.f32 0.0, %v1963
      %v1965 = vpop.f32.mrf.mxu0
      %v1966 = vpop.f32.mrf.mxu0
      %v1967 = vadd.f32 0.0, %v1966
      %v1968 = vpop.f32.mrf.mxu0
      %1969 = vmatprep.mubr.bf16.mxu0 0
      %1970 = vmatmul.mubr.bf16.gmra.mxu0 %v1821
      %v1971 = vpop.f32.mrf.mxu0
      %v1972 = vadd.f32 0.0, %v1971
      %v1973 = vpop.f32.mrf.mxu0
      %v1974 = vpop.f32.mrf.mxu0
      %v1975 = vadd.f32 0.0, %v1974
      %v1976 = vpop.f32.mrf.mxu0
      %1977 = vmatprep.mubr.bf16.mxu0 0
      %1978 = vmatmul.mubr.bf16.gmra.mxu0 %v1824
      %v1979 = vpop.f32.mrf.mxu0
      %v1980 = vadd.f32 0.0, %v1979
      %v1981 = vpop.f32.mrf.mxu0
      %v1982 = vpop.f32.mrf.mxu0
      %v1983 = vadd.f32 0.0, %v1982
      %v1984 = vpop.f32.mrf.mxu0
      %1985 = vmatprep.mubr.bf16.mxu0 0
      %1986 = vmatmul.mubr.bf16.gmra.mxu0 %v1827
      %v1987 = vpop.f32.mrf.mxu0
      %v1988 = vadd.f32 0.0, %v1987
      %v1989 = vpop.f32.mrf.mxu0
      %v1990 = vpop.f32.mrf.mxu0
      %v1991 = vadd.f32 0.0, %v1990
      %v1992 = vpop.f32.mrf.mxu0
      %1993 = vmatprep.mubr.bf16.mxu0 0
      %1994 = vmatmul.mubr.bf16.gmra.mxu0 %v1830
      %v1995 = vpop.f32.mrf.mxu0
      %v1996 = vadd.f32 0.0, %v1995
      %v1997 = vpop.f32.mrf.mxu0
      %v1998 = vpop.f32.mrf.mxu0
      %v1999 = vadd.f32 0.0, %v1998
      %v2000 = vpop.f32.mrf.mxu0
      %2001 = vmatprep.mubr.bf16.mxu0 0
      %2002 = vmatmul.mubr.bf16.gmra.mxu0 %v1833
      %v2003 = vpop.f32.mrf.mxu0
      %v2004 = vadd.f32 0.0, %v2003
      %v2005 = vpop.f32.mrf.mxu0
      %v2006 = vpop.f32.mrf.mxu0
      %v2007 = vadd.f32 0.0, %v2006
      %v2008 = vpop.f32.mrf.mxu0
      %2009 = vmatprep.mubr.bf16.mxu0 0
      %2010 = vmatmul.mubr.bf16.gmra.mxu0 %v1836
      %v2011 = vpop.f32.mrf.mxu0
      %v2012 = vadd.f32 0.0, %v2011
      %v2013 = vpop.f32.mrf.mxu0
      %v2014 = vpop.f32.mrf.mxu0
      %v2015 = vadd.f32 0.0, %v2014
      %v2016 = vpop.f32.mrf.mxu0
      %2017 = vdwg.mxu0
      %v2018 = vadd.f32 %v1707, %v1876
      %v2019 = vadd.f32 %v1708, %v1879
      %v2020 = vadd.f32 %v1709, %v1884
      %v2021 = vadd.f32 %v1710, %v1887
      %v2022 = vadd.f32 %v1711, %v1892
      %v2023 = vadd.f32 %v1712, %v1895
      %v2024 = vadd.f32 %v1713, %v1900
      %v2025 = vadd.f32 %v1714, %v1903
      %v2026 = vadd.f32 %v1715, %v1908
      %v2027 = vadd.f32 %v1716, %v1911
      %v2028 = vadd.f32 %v1717, %v1916
      %v2029 = vadd.f32 %v1718, %v1919
      %v2030 = vadd.f32 %v1719, %v1924
      %v2031 = vadd.f32 %v1720, %v1927
      %v2032 = vadd.f32 %v1721, %v1932
      %v2033 = vadd.f32 %v1722, %v1935
      %v2034 = vadd.f32 %v1723, %v1940
      %v2035 = vadd.f32 %v1724, %v1943
      %v2036 = vadd.f32 %v1725, %v1948
      %v2037 = vadd.f32 %v1726, %v1951
      %v2038 = vadd.f32 %v1727, %v1956
      %v2039 = vadd.f32 %v1728, %v1959
      %v2040 = vadd.f32 %v1729, %v1964
      %v2041 = vadd.f32 %v1730, %v1967
      %v2042 = vadd.f32 %v1731, %v1972
      %v2043 = vadd.f32 %v1732, %v1975
      %v2044 = vadd.f32 %v1733, %v1980
      %v2045 = vadd.f32 %v1734, %v1983
      %v2046 = vadd.f32 %v1735, %v1988
      %v2047 = vadd.f32 %v1736, %v1991
      %v2048 = vadd.f32 %v1737, %v1996
      %v2049 = vadd.f32 %v1738, %v1999
      %v2050 = vadd.f32 %v1739, %v2004
      %v2051 = vadd.f32 %v1740, %v2007
      %v2052 = vadd.f32 %v1741, %v2012
      %v2053 = vadd.f32 %v1742, %v2015
      %s2054 = scalar_lea.vmem %s1, 12
      %v2055 = vld [vmem:[%s2054] sm:$0x3]
      %v2057 = vrot.slane %v233, 2
      %v2058 = vsel %vm1746, %v1782, %v2057
      %v2060 = vsel %vm381, %v2058, 0
      %v2063 = vand.u32 %v2055, %v439
      %2065 = vmatprep.subr.bf16.mxu0 0
      %2066 = vmatpush1.bf16.msra.mxu0 0
      %2067 = vmatprep.subr.bf16.mxu0 0
      %2068 = vmatpush1.bf16.msra.mxu0 0
      %2069 = vmatprep.subr.bf16.mxu0 0
      %2070 = vmatpush1.bf16.msra.mxu0 0
      %2071 = vmatprep.subr.bf16.mxu0 0
      %2072 = vmatpush1.bf16.msra.mxu0 0
      %2073 = vmatprep.subr.bf16.mxu0 0
      %2074 = vmatpush1.bf16.msra.mxu0 0
      %2075 = vmatprep.subr.bf16.mxu0 0
      %2076 = vmatpush1.bf16.msra.mxu0 0
      %2077 = vmatprep.subr.bf16.mxu0 0
      %2078 = vmatpush1.bf16.msra.mxu0 0
      %2079 = vmatprep.subr.bf16.mxu0 0
      %2080 = vmatpush1.bf16.msra.mxu0 %v2063
      %2081 = vmatprep.subr.bf16.mxu0 0
      %2082 = vmatpush2.bf16.msra.mxu0 0
      %2083 = vmatprep.subr.bf16.mxu0 0
      %2084 = vmatpush2.bf16.msra.mxu0 0
      %2085 = vmatprep.subr.bf16.mxu0 0
      %2086 = vmatpush2.bf16.msra.mxu0 0
      %2087 = vmatprep.subr.bf16.mxu0 0
      %2088 = vmatpush2.bf16.msra.mxu0 0
      %2089 = vmatprep.subr.bf16.mxu0 0
      %2090 = vmatpush2.bf16.msra.mxu0 0
      %2091 = vmatprep.subr.bf16.mxu0 0
      %2092 = vmatpush2.bf16.msra.mxu0 0
      %2093 = vmatprep.subr.bf16.mxu0 0
      %2094 = vmatpush2.bf16.msra.mxu0 0
      %2095 = vmatprep.subr.bf16.mxu0 0
      %2096 = vmatpush2.bf16.msra.mxu0 0
      %2097 = vmatprep.mubr.bf16.mxu0 0
      %2098 = vmatmul.mubr.bf16.gmra.mxu0 %v1788
      %v2099 = vpop.f32.mrf.mxu0
      %v2100 = vadd.f32 0.0, %v2099
      %v2101 = vpop.f32.mrf.mxu0
      %v2102 = vpop.f32.mrf.mxu0
      %v2103 = vadd.f32 0.0, %v2102
      %v2104 = vpop.f32.mrf.mxu0
      %2105 = vmatprep.mubr.bf16.mxu0 0
      %2106 = vmatmul.mubr.bf16.gmra.mxu0 %v1791
      %v2107 = vpop.f32.mrf.mxu0
      %v2108 = vadd.f32 0.0, %v2107
      %v2109 = vpop.f32.mrf.mxu0
      %v2110 = vpop.f32.mrf.mxu0
      %v2111 = vadd.f32 0.0, %v2110
      %v2112 = vpop.f32.mrf.mxu0
      %2113 = vmatprep.mubr.bf16.mxu0 0
      %2114 = vmatmul.mubr.bf16.gmra.mxu0 %v1794
      %v2115 = vpop.f32.mrf.mxu0
      %v2116 = vadd.f32 0.0, %v2115
      %v2117 = vpop.f32.mrf.mxu0
      %v2118 = vpop.f32.mrf.mxu0
      %v2119 = vadd.f32 0.0, %v2118
      %v2120 = vpop.f32.mrf.mxu0
      %2121 = vmatprep.mubr.bf16.mxu0 0
      %2122 = vmatmul.mubr.bf16.gmra.mxu0 %v1797
      %v2123 = vpop.f32.mrf.mxu0
      %v2124 = vadd.f32 0.0, %v2123
      %v2125 = vpop.f32.mrf.mxu0
      %v2126 = vpop.f32.mrf.mxu0
      %v2127 = vadd.f32 0.0, %v2126
      %v2128 = vpop.f32.mrf.mxu0
      %2129 = vmatprep.mubr.bf16.mxu0 0
      %2130 = vmatmul.mubr.bf16.gmra.mxu0 %v1800
      %v2131 = vpop.f32.mrf.mxu0
      %v2132 = vadd.f32 0.0, %v2131
      %v2133 = vpop.f32.mrf.mxu0
      %v2134 = vpop.f32.mrf.mxu0
      %v2135 = vadd.f32 0.0, %v2134
      %v2136 = vpop.f32.mrf.mxu0
      %2137 = vmatprep.mubr.bf16.mxu0 0
      %2138 = vmatmul.mubr.bf16.gmra.mxu0 %v1803
      %v2139 = vpop.f32.mrf.mxu0
      %v2140 = vadd.f32 0.0, %v2139
      %v2141 = vpop.f32.mrf.mxu0
      %v2142 = vpop.f32.mrf.mxu0
      %v2143 = vadd.f32 0.0, %v2142
      %v2144 = vpop.f32.mrf.mxu0
      %2145 = vmatprep.mubr.bf16.mxu0 0
      %2146 = vmatmul.mubr.bf16.gmra.mxu0 %v1806
      %v2147 = vpop.f32.mrf.mxu0
      %v2148 = vadd.f32 0.0, %v2147
      %v2149 = vpop.f32.mrf.mxu0
      %v2150 = vpop.f32.mrf.mxu0
      %v2151 = vadd.f32 0.0, %v2150
      %v2152 = vpop.f32.mrf.mxu0
      %2153 = vmatprep.mubr.bf16.mxu0 0
      %2154 = vmatmul.mubr.bf16.gmra.mxu0 %v1809
      %v2155 = vpop.f32.mrf.mxu0
      %v2156 = vadd.f32 0.0, %v2155
      %v2157 = vpop.f32.mrf.mxu0
      %v2158 = vpop.f32.mrf.mxu0
      %v2159 = vadd.f32 0.0, %v2158
      %v2160 = vpop.f32.mrf.mxu0
      %2161 = vmatprep.mubr.bf16.mxu0 0
      %2162 = vmatmul.mubr.bf16.gmra.mxu0 %v1812
      %v2163 = vpop.f32.mrf.mxu0
      %v2164 = vadd.f32 0.0, %v2163
      %v2165 = vpop.f32.mrf.mxu0
      %v2166 = vpop.f32.mrf.mxu0
      %v2167 = vadd.f32 0.0, %v2166
      %v2168 = vpop.f32.mrf.mxu0
      %2169 = vmatprep.mubr.bf16.mxu0 0
      %2170 = vmatmul.mubr.bf16.gmra.mxu0 %v1815
      %v2171 = vpop.f32.mrf.mxu0
      %v2172 = vadd.f32 0.0, %v2171
      %v2173 = vpop.f32.mrf.mxu0
      %v2174 = vpop.f32.mrf.mxu0
      %v2175 = vadd.f32 0.0, %v2174
      %v2176 = vpop.f32.mrf.mxu0
      %2177 = vmatprep.mubr.bf16.mxu0 0
      %2178 = vmatmul.mubr.bf16.gmra.mxu0 %v1818
      %v2179 = vpop.f32.mrf.mxu0
      %v2180 = vadd.f32 0.0, %v2179
      %v2181 = vpop.f32.mrf.mxu0
      %v2182 = vpop.f32.mrf.mxu0
      %v2183 = vadd.f32 0.0, %v2182
      %v2184 = vpop.f32.mrf.mxu0
      %2185 = vmatprep.mubr.bf16.mxu0 0
      %2186 = vmatmul.mubr.bf16.gmra.mxu0 %v1821
      %v2187 = vpop.f32.mrf.mxu0
      %v2188 = vadd.f32 0.0, %v2187
      %v2189 = vpop.f32.mrf.mxu0
      %v2190 = vpop.f32.mrf.mxu0
      %v2191 = vadd.f32 0.0, %v2190
      %v2192 = vpop.f32.mrf.mxu0
      %2193 = vmatprep.mubr.bf16.mxu0 0
      %2194 = vmatmul.mubr.bf16.gmra.mxu0 %v1824
      %v2195 = vpop.f32.mrf.mxu0
      %v2196 = vadd.f32 0.0, %v2195
      %v2197 = vpop.f32.mrf.mxu0
      %v2198 = vpop.f32.mrf.mxu0
      %v2199 = vadd.f32 0.0, %v2198
      %v2200 = vpop.f32.mrf.mxu0
      %2201 = vmatprep.mubr.bf16.mxu0 0
      %2202 = vmatmul.mubr.bf16.gmra.mxu0 %v1827
      %v2203 = vpop.f32.mrf.mxu0
      %v2204 = vadd.f32 0.0, %v2203
      %v2205 = vpop.f32.mrf.mxu0
      %v2206 = vpop.f32.mrf.mxu0
      %v2207 = vadd.f32 0.0, %v2206
      %v2208 = vpop.f32.mrf.mxu0
      %2209 = vmatprep.mubr.bf16.mxu0 0
      %2210 = vmatmul.mubr.bf16.gmra.mxu0 %v1830
      %v2211 = vpop.f32.mrf.mxu0
      %v2212 = vadd.f32 0.0, %v2211
      %v2213 = vpop.f32.mrf.mxu0
      %v2214 = vpop.f32.mrf.mxu0
      %v2215 = vadd.f32 0.0, %v2214
      %v2216 = vpop.f32.mrf.mxu0
      %2217 = vmatprep.mubr.bf16.mxu0 0
      %2218 = vmatmul.mubr.bf16.gmra.mxu0 %v1833
      %v2219 = vpop.f32.mrf.mxu0
      %v2220 = vadd.f32 0.0, %v2219
      %v2221 = vpop.f32.mrf.mxu0
      %v2222 = vpop.f32.mrf.mxu0
      %v2223 = vadd.f32 0.0, %v2222
      %v2224 = vpop.f32.mrf.mxu0
      %2225 = vmatprep.mubr.bf16.mxu0 0
      %2226 = vmatmul.mubr.bf16.gmra.mxu0 %v1836
      %v2227 = vpop.f32.mrf.mxu0
      %v2228 = vadd.f32 0.0, %v2227
      %v2229 = vpop.f32.mrf.mxu0
      %v2230 = vpop.f32.mrf.mxu0
      %v2231 = vadd.f32 0.0, %v2230
      %v2232 = vpop.f32.mrf.mxu0
      %2233 = vmatprep.mubr.bf16.mxu0 0
      %2234 = vmatmul.mubr.bf16.gmra.mxu0 %v2060
      %v2235 = vpop.f32.mrf.mxu0
      %v2236 = vadd.f32 0.0, %v2235
      %v2237 = vpop.f32.mrf.mxu0
      %v2238 = vpop.f32.mrf.mxu0
      %v2239 = vadd.f32 0.0, %v2238
      %v2240 = vpop.f32.mrf.mxu0
      %2241 = vdwg.mxu0
      %v2242 = vadd.f32 %v2018, %v2100
      %v2243 = vadd.f32 %v2019, %v2103
      %v2244 = vadd.f32 %v2020, %v2108
      %v2245 = vadd.f32 %v2021, %v2111
      %v2246 = vadd.f32 %v2022, %v2116
      %v2247 = vadd.f32 %v2023, %v2119
      %v2248 = vadd.f32 %v2024, %v2124
      %v2249 = vadd.f32 %v2025, %v2127
      %v2250 = vadd.f32 %v2026, %v2132
      %v2251 = vadd.f32 %v2027, %v2135
      %v2252 = vadd.f32 %v2028, %v2140
      %v2253 = vadd.f32 %v2029, %v2143
      %v2254 = vadd.f32 %v2030, %v2148
      %v2255 = vadd.f32 %v2031, %v2151
      %v2256 = vadd.f32 %v2032, %v2156
      %v2257 = vadd.f32 %v2033, %v2159
      %v2258 = vadd.f32 %v2034, %v2164
      %v2259 = vadd.f32 %v2035, %v2167
      %v2260 = vadd.f32 %v2036, %v2172
      %v2261 = vadd.f32 %v2037, %v2175
      %v2262 = vadd.f32 %v2038, %v2180
      %v2263 = vadd.f32 %v2039, %v2183
      %v2264 = vadd.f32 %v2040, %v2188
      %v2265 = vadd.f32 %v2041, %v2191
      %v2266 = vadd.f32 %v2042, %v2196
      %v2267 = vadd.f32 %v2043, %v2199
      %v2268 = vadd.f32 %v2044, %v2204
      %v2269 = vadd.f32 %v2045, %v2207
      %v2270 = vadd.f32 %v2046, %v2212
      %v2271 = vadd.f32 %v2047, %v2215
      %v2272 = vadd.f32 %v2048, %v2220
      %v2273 = vadd.f32 %v2049, %v2223
      %v2274 = vadd.f32 %v2050, %v2228
      %v2275 = vadd.f32 %v2051, %v2231
      %v2276 = vadd.f32 %v2052, %v2236
      %v2277 = vadd.f32 %v2053, %v2239
      %s2278 = scalar_lea.vmem %s1, 14
      %v2279 = vld [vmem:[%s2278] sm:$0x3]
      %vm2280 = vsmask.f32 5376
      %v2281 = vrot.slane %v258, 2
      %v2282 = vrot.slane %v254, 3
      %v2283 = vor.u32 %v2281, %v2282
      %v2284 = vrot.slane %v266, 2
      %v2285 = vrot.slane %v262, 3
      %v2286 = vor.u32 %v2284, %v2285
      %v2287 = vsel %vm2280, %v2283, %v2286
      %v2288 = vrot.slane %v274, 2
      %v2289 = vrot.slane %v270, 3
      %v2290 = vor.u32 %v2288, %v2289
      %v2291 = vsel %vm2280, %v2286, %v2290
      %v2292 = vrot.slane %v282, 2
      %v2293 = vrot.slane %v278, 3
      %v2294 = vor.u32 %v2292, %v2293
      %v2295 = vsel %vm2280, %v2290, %v2294
      %v2296 = vrot.slane %v290, 2
      %v2297 = vrot.slane %v286, 3
      %v2298 = vor.u32 %v2296, %v2297
      %v2299 = vsel %vm2280, %v2294, %v2298
      %v2300 = vrot.slane %v298, 2
      %v2301 = vrot.slane %v294, 3
      %v2302 = vor.u32 %v2300, %v2301
      %v2303 = vsel %vm2280, %v2298, %v2302
      %v2304 = vrot.slane %v306, 2
      %v2305 = vrot.slane %v302, 3
      %v2306 = vor.u32 %v2304, %v2305
      %v2307 = vsel %vm2280, %v2302, %v2306
      %v2308 = vrot.slane %v314, 2
      %v2309 = vrot.slane %v310, 3
      %v2310 = vor.u32 %v2308, %v2309
      %v2311 = vsel %vm2280, %v2306, %v2310
      %v2312 = vrot.slane %v322, 2
      %v2313 = vrot.slane %v318, 3
      %v2314 = vor.u32 %v2312, %v2313
      %v2315 = vsel %vm2280, %v2310, %v2314
      %v2316 = vrot.slane %v330, 2
      %v2317 = vrot.slane %v326, 3
      %v2318 = vor.u32 %v2316, %v2317
      %v2319 = vsel %vm2280, %v2314, %v2318
      %v2320 = vrot.slane %v338, 2
      %v2321 = vrot.slane %v334, 3
      %v2322 = vor.u32 %v2320, %v2321
      %v2323 = vsel %vm2280, %v2318, %v2322
      %v2324 = vrot.slane %v346, 2
      %v2325 = vrot.slane %v342, 3
      %v2326 = vor.u32 %v2324, %v2325
      %v2327 = vsel %vm2280, %v2322, %v2326
      %v2328 = vrot.slane %v354, 2
      %v2329 = vrot.slane %v350, 3
      %v2330 = vor.u32 %v2328, %v2329
      %v2331 = vsel %vm2280, %v2326, %v2330
      %v2332 = vrot.slane %v362, 2
      %v2333 = vrot.slane %v358, 3
      %v2334 = vor.u32 %v2332, %v2333
      %v2335 = vsel %vm2280, %v2330, %v2334
      %v2336 = vrot.slane %v370, 2
      %v2337 = vrot.slane %v366, 3
      %v2338 = vor.u32 %v2336, %v2337
      %v2339 = vsel %vm2280, %v2334, %v2338
      %v2340 = vrot.slane %v378, 2
      %v2341 = vrot.slane %v374, 3
      %v2342 = vor.u32 %v2340, %v2341
      %v2343 = vsel %vm2280, %v2338, %v2342
      %v2344 = vrot.slane %v1460, 2
      %v2345 = vrot.slane %v1463, 3
      %v2346 = vor.u32 %v2344, %v2345
      %v2347 = vsel %vm2280, %v2342, %v2346
      %v2348 = vshrl.u32 %v232, 16
      %v2350 = vrot.slane %v2348, 2
      %v2351 = vrot.slane %v1469, 3
      %v2352 = vor.u32 %v2350, %v2351
      %v2353 = vsel %vm2280, %v2346, %v2352
      %v2355 = vshrl.u32 %v233, 16
      %v2357 = vrot.slane %v2355, 2
      %v2358 = vshll.u32 %v233, 16
      %v2360 = vrot.slane %v2358, 3
      %v2361 = vor.u32 %v2357, %v2360
      %v2362 = vsel %vm2280, %v2352, %v2361
      %v2364 = vsel %vm381, %v2287, 0
      %v2367 = vsel %vm381, %v2291, 0
      %v2370 = vsel %vm381, %v2295, 0
      %v2373 = vsel %vm381, %v2299, 0
      %v2376 = vsel %vm381, %v2303, 0
      %v2379 = vsel %vm381, %v2307, 0
      %v2382 = vsel %vm381, %v2311, 0
      %v2385 = vsel %vm381, %v2315, 0
      %v2388 = vsel %vm381, %v2319, 0
      %v2391 = vsel %vm381, %v2323, 0
      %v2394 = vsel %vm381, %v2327, 0
      %v2397 = vsel %vm381, %v2331, 0
      %v2400 = vsel %vm381, %v2335, 0
      %v2403 = vsel %vm381, %v2339, 0
      %v2406 = vsel %vm381, %v2343, 0
      %v2409 = vsel %vm381, %v2347, 0
      %v2412 = vsel %vm381, %v2353, 0
      %v2415 = vsel %vm381, %v2362, 0
      %v2418 = vand.u32 %v2279, %v439
      %2420 = vmatprep.subr.bf16.mxu0 0
      %2421 = vmatpush1.bf16.msra.mxu0 0
      %2422 = vmatprep.subr.bf16.mxu0 0
      %2423 = vmatpush1.bf16.msra.mxu0 0
      %2424 = vmatprep.subr.bf16.mxu0 0
      %2425 = vmatpush1.bf16.msra.mxu0 0
      %2426 = vmatprep.subr.bf16.mxu0 0
      %2427 = vmatpush1.bf16.msra.mxu0 0
      %2428 = vmatprep.subr.bf16.mxu0 0
      %2429 = vmatpush1.bf16.msra.mxu0 0
      %2430 = vmatprep.subr.bf16.mxu0 0
      %2431 = vmatpush1.bf16.msra.mxu0 0
      %2432 = vmatprep.subr.bf16.mxu0 0
      %2433 = vmatpush1.bf16.msra.mxu0 0
      %2434 = vmatprep.subr.bf16.mxu0 0
      %2435 = vmatpush1.bf16.msra.mxu0 %v2418
      %2436 = vmatprep.subr.bf16.mxu0 0
      %2437 = vmatpush2.bf16.msra.mxu0 0
      %2438 = vmatprep.subr.bf16.mxu0 0
      %2439 = vmatpush2.bf16.msra.mxu0 0
      %2440 = vmatprep.subr.bf16.mxu0 0
      %2441 = vmatpush2.bf16.msra.mxu0 0
      %2442 = vmatprep.subr.bf16.mxu0 0
      %2443 = vmatpush2.bf16.msra.mxu0 0
      %2444 = vmatprep.subr.bf16.mxu0 0
      %2445 = vmatpush2.bf16.msra.mxu0 0
      %2446 = vmatprep.subr.bf16.mxu0 0
      %2447 = vmatpush2.bf16.msra.mxu0 0
      %2448 = vmatprep.subr.bf16.mxu0 0
      %2449 = vmatpush2.bf16.msra.mxu0 0
      %2450 = vmatprep.subr.bf16.mxu0 0
      %2451 = vmatpush2.bf16.msra.mxu0 0
      %2452 = vmatprep.mubr.bf16.mxu0 0
      %2453 = vmatmul.mubr.bf16.gmra.mxu0 %v2364
      %v2454 = vpop.f32.mrf.mxu0
      %v2455 = vadd.f32 0.0, %v2454
      %v2456 = vpop.f32.mrf.mxu0
      %v2457 = vpop.f32.mrf.mxu0
      %v2458 = vadd.f32 0.0, %v2457
      %v2459 = vpop.f32.mrf.mxu0
      %2460 = vmatprep.mubr.bf16.mxu0 0
      %2461 = vmatmul.mubr.bf16.gmra.mxu0 %v2367
      %v2462 = vpop.f32.mrf.mxu0
      %v2463 = vadd.f32 0.0, %v2462
      %v2464 = vpop.f32.mrf.mxu0
      %v2465 = vpop.f32.mrf.mxu0
      %v2466 = vadd.f32 0.0, %v2465
      %v2467 = vpop.f32.mrf.mxu0
      %2468 = vmatprep.mubr.bf16.mxu0 0
      %2469 = vmatmul.mubr.bf16.gmra.mxu0 %v2370
      %v2470 = vpop.f32.mrf.mxu0
      %v2471 = vadd.f32 0.0, %v2470
      %v2472 = vpop.f32.mrf.mxu0
      %v2473 = vpop.f32.mrf.mxu0
      %v2474 = vadd.f32 0.0, %v2473
      %v2475 = vpop.f32.mrf.mxu0
      %2476 = vmatprep.mubr.bf16.mxu0 0
      %2477 = vmatmul.mubr.bf16.gmra.mxu0 %v2373
      %v2478 = vpop.f32.mrf.mxu0
      %v2479 = vadd.f32 0.0, %v2478
      %v2480 = vpop.f32.mrf.mxu0
      %v2481 = vpop.f32.mrf.mxu0
      %v2482 = vadd.f32 0.0, %v2481
      %v2483 = vpop.f32.mrf.mxu0
      %2484 = vmatprep.mubr.bf16.mxu0 0
      %2485 = vmatmul.mubr.bf16.gmra.mxu0 %v2376
      %v2486 = vpop.f32.mrf.mxu0
      %v2487 = vadd.f32 0.0, %v2486
      %v2488 = vpop.f32.mrf.mxu0
      %v2489 = vpop.f32.mrf.mxu0
      %v2490 = vadd.f32 0.0, %v2489
      %v2491 = vpop.f32.mrf.mxu0
      %2492 = vmatprep.mubr.bf16.mxu0 0
      %2493 = vmatmul.mubr.bf16.gmra.mxu0 %v2379
      %v2494 = vpop.f32.mrf.mxu0
      %v2495 = vadd.f32 0.0, %v2494
      %v2496 = vpop.f32.mrf.mxu0
      %v2497 = vpop.f32.mrf.mxu0
      %v2498 = vadd.f32 0.0, %v2497
      %v2499 = vpop.f32.mrf.mxu0
      %2500 = vmatprep.mubr.bf16.mxu0 0
      %2501 = vmatmul.mubr.bf16.gmra.mxu0 %v2382
      %v2502 = vpop.f32.mrf.mxu0
      %v2503 = vadd.f32 0.0, %v2502
      %v2504 = vpop.f32.mrf.mxu0
      %v2505 = vpop.f32.mrf.mxu0
      %v2506 = vadd.f32 0.0, %v2505
      %v2507 = vpop.f32.mrf.mxu0
      %2508 = vmatprep.mubr.bf16.mxu0 0
      %2509 = vmatmul.mubr.bf16.gmra.mxu0 %v2385
      %v2510 = vpop.f32.mrf.mxu0
      %v2511 = vadd.f32 0.0, %v2510
      %v2512 = vpop.f32.mrf.mxu0
      %v2513 = vpop.f32.mrf.mxu0
      %v2514 = vadd.f32 0.0, %v2513
      %v2515 = vpop.f32.mrf.mxu0
      %2516 = vmatprep.mubr.bf16.mxu0 0
      %2517 = vmatmul.mubr.bf16.gmra.mxu0 %v2388
      %v2518 = vpop.f32.mrf.mxu0
      %v2519 = vadd.f32 0.0, %v2518
      %v2520 = vpop.f32.mrf.mxu0
      %v2521 = vpop.f32.mrf.mxu0
      %v2522 = vadd.f32 0.0, %v2521
      %v2523 = vpop.f32.mrf.mxu0
      %2524 = vmatprep.mubr.bf16.mxu0 0
      %2525 = vmatmul.mubr.bf16.gmra.mxu0 %v2391
      %v2526 = vpop.f32.mrf.mxu0
      %v2527 = vadd.f32 0.0, %v2526
      %v2528 = vpop.f32.mrf.mxu0
      %v2529 = vpop.f32.mrf.mxu0
      %v2530 = vadd.f32 0.0, %v2529
      %v2531 = vpop.f32.mrf.mxu0
      %2532 = vmatprep.mubr.bf16.mxu0 0
      %2533 = vmatmul.mubr.bf16.gmra.mxu0 %v2394
      %v2534 = vpop.f32.mrf.mxu0
      %v2535 = vadd.f32 0.0, %v2534
      %v2536 = vpop.f32.mrf.mxu0
      %v2537 = vpop.f32.mrf.mxu0
      %v2538 = vadd.f32 0.0, %v2537
      %v2539 = vpop.f32.mrf.mxu0
      %2540 = vmatprep.mubr.bf16.mxu0 0
      %2541 = vmatmul.mubr.bf16.gmra.mxu0 %v2397
      %v2542 = vpop.f32.mrf.mxu0
      %v2543 = vadd.f32 0.0, %v2542
      %v2544 = vpop.f32.mrf.mxu0
      %v2545 = vpop.f32.mrf.mxu0
      %v2546 = vadd.f32 0.0, %v2545
      %v2547 = vpop.f32.mrf.mxu0
      %2548 = vmatprep.mubr.bf16.mxu0 0
      %2549 = vmatmul.mubr.bf16.gmra.mxu0 %v2400
      %v2550 = vpop.f32.mrf.mxu0
      %v2551 = vadd.f32 0.0, %v2550
      %v2552 = vpop.f32.mrf.mxu0
      %v2553 = vpop.f32.mrf.mxu0
      %v2554 = vadd.f32 0.0, %v2553
      %v2555 = vpop.f32.mrf.mxu0
      %2556 = vmatprep.mubr.bf16.mxu0 0
      %2557 = vmatmul.mubr.bf16.gmra.mxu0 %v2403
      %v2558 = vpop.f32.mrf.mxu0
      %v2559 = vadd.f32 0.0, %v2558
      %v2560 = vpop.f32.mrf.mxu0
      %v2561 = vpop.f32.mrf.mxu0
      %v2562 = vadd.f32 0.0, %v2561
      %v2563 = vpop.f32.mrf.mxu0
      %2564 = vmatprep.mubr.bf16.mxu0 0
      %2565 = vmatmul.mubr.bf16.gmra.mxu0 %v2406
      %v2566 = vpop.f32.mrf.mxu0
      %v2567 = vadd.f32 0.0, %v2566
      %v2568 = vpop.f32.mrf.mxu0
      %v2569 = vpop.f32.mrf.mxu0
      %v2570 = vadd.f32 0.0, %v2569
      %v2571 = vpop.f32.mrf.mxu0
      %2572 = vmatprep.mubr.bf16.mxu0 0
      %2573 = vmatmul.mubr.bf16.gmra.mxu0 %v2409
      %v2574 = vpop.f32.mrf.mxu0
      %v2575 = vadd.f32 0.0, %v2574
      %v2576 = vpop.f32.mrf.mxu0
      %v2577 = vpop.f32.mrf.mxu0
      %v2578 = vadd.f32 0.0, %v2577
      %v2579 = vpop.f32.mrf.mxu0
      %2580 = vmatprep.mubr.bf16.mxu0 0
      %2581 = vmatmul.mubr.bf16.gmra.mxu0 %v2412
      %v2582 = vpop.f32.mrf.mxu0
      %v2583 = vadd.f32 0.0, %v2582
      %v2584 = vpop.f32.mrf.mxu0
      %v2585 = vpop.f32.mrf.mxu0
      %v2586 = vadd.f32 0.0, %v2585
      %v2587 = vpop.f32.mrf.mxu0
      %2588 = vmatprep.mubr.bf16.mxu0 0
      %2589 = vmatmul.mubr.bf16.gmra.mxu0 %v2415
      %v2590 = vpop.f32.mrf.mxu0
      %v2591 = vadd.f32 0.0, %v2590
      %v2592 = vpop.f32.mrf.mxu0
      %v2593 = vpop.f32.mrf.mxu0
      %v2594 = vadd.f32 0.0, %v2593
      %v2595 = vpop.f32.mrf.mxu0
      %2596 = vdwg.mxu0
      %v2597 = vadd.f32 %v2242, %v2455
      %v2598 = vadd.f32 %v2243, %v2458
      %v2599 = vadd.f32 %v2244, %v2463
      %v2600 = vadd.f32 %v2245, %v2466
      %v2601 = vadd.f32 %v2246, %v2471
      %v2602 = vadd.f32 %v2247, %v2474
      %v2603 = vadd.f32 %v2248, %v2479
      %v2604 = vadd.f32 %v2249, %v2482
      %v2605 = vadd.f32 %v2250, %v2487
      %v2606 = vadd.f32 %v2251, %v2490
      %v2607 = vadd.f32 %v2252, %v2495
      %v2608 = vadd.f32 %v2253, %v2498
      %v2609 = vadd.f32 %v2254, %v2503
      %v2610 = vadd.f32 %v2255, %v2506
      %v2611 = vadd.f32 %v2256, %v2511
      %v2612 = vadd.f32 %v2257, %v2514
      %v2613 = vadd.f32 %v2258, %v2519
      %v2614 = vadd.f32 %v2259, %v2522
      %v2615 = vadd.f32 %v2260, %v2527
      %v2616 = vadd.f32 %v2261, %v2530
      %v2617 = vadd.f32 %v2262, %v2535
      %v2618 = vadd.f32 %v2263, %v2538
      %v2619 = vadd.f32 %v2264, %v2543
      %v2620 = vadd.f32 %v2265, %v2546
      %v2621 = vadd.f32 %v2266, %v2551
      %v2622 = vadd.f32 %v2267, %v2554
      %v2623 = vadd.f32 %v2268, %v2559
      %v2624 = vadd.f32 %v2269, %v2562
      %v2625 = vadd.f32 %v2270, %v2567
      %v2626 = vadd.f32 %v2271, %v2570
      %v2627 = vadd.f32 %v2272, %v2575
      %v2628 = vadd.f32 %v2273, %v2578
      %v2629 = vadd.f32 %v2274, %v2583
      %v2630 = vadd.f32 %v2275, %v2586
      %v2631 = vadd.f32 %v2276, %v2591
      %v2632 = vadd.f32 %v2277, %v2594
      %s2633 = scalar_lea.vmem %s1, 16
      %v2634 = vld [vmem:[%s2633] sm:$0x3]
      %vm2635 = vcmask 1044480
      %v2636 = vrot.slane %v215, 3
      %v2637 = vrot.slane %v216, 3
      %v2638 = vsel %vm2635, %v2636, %v2637
      %v2639 = vrot.slane %v217, 3
      %v2640 = vsel %vm2635, %v2637, %v2639
      %v2641 = vrot.slane %v218, 3
      %v2642 = vsel %vm2635, %v2639, %v2641
      %v2643 = vrot.slane %v219, 3
      %v2644 = vsel %vm2635, %v2641, %v2643
      %v2645 = vrot.slane %v220, 3
      %v2646 = vsel %vm2635, %v2643, %v2645
      %v2647 = vrot.slane %v221, 3
      %v2648 = vsel %vm2635, %v2645, %v2647
      %v2649 = vrot.slane %v222, 3
      %v2650 = vsel %vm2635, %v2647, %v2649
      %v2651 = vrot.slane %v223, 3
      %v2652 = vsel %vm2635, %v2649, %v2651
      %v2653 = vrot.slane %v224, 3
      %v2654 = vsel %vm2635, %v2651, %v2653
      %v2655 = vrot.slane %v225, 3
      %v2656 = vsel %vm2635, %v2653, %v2655
      %v2657 = vrot.slane %v226, 3
      %v2658 = vsel %vm2635, %v2655, %v2657
      %v2659 = vrot.slane %v227, 3
      %v2660 = vsel %vm2635, %v2657, %v2659
      %v2661 = vrot.slane %v228, 3
      %v2662 = vsel %vm2635, %v2659, %v2661
      %v2663 = vrot.slane %v229, 3
      %v2664 = vsel %vm2635, %v2661, %v2663
      %v2665 = vrot.slane %v230, 3
      %v2666 = vsel %vm2635, %v2663, %v2665
      %v2667 = vrot.slane %v231, 3
      %v2668 = vsel %vm2635, %v2665, %v2667
      %v2669 = vrot.slane %v232, 3
      %v2670 = vsel %vm2635, %v2667, %v2669
      %v2671 = vrot.slane %v233, 3
      %v2672 = vsel %vm2635, %v2669, %v2671
      %v2674 = vsel %vm381, %v2638, 0
      %v2677 = vsel %vm381, %v2640, 0
      %v2680 = vsel %vm381, %v2642, 0
      %v2683 = vsel %vm381, %v2644, 0
      %v2686 = vsel %vm381, %v2646, 0
      %v2689 = vsel %vm381, %v2648, 0
      %v2692 = vsel %vm381, %v2650, 0
      %v2695 = vsel %vm381, %v2652, 0
      %v2698 = vsel %vm381, %v2654, 0
      %v2701 = vsel %vm381, %v2656, 0
      %v2704 = vsel %vm381, %v2658, 0
      %v2707 = vsel %vm381, %v2660, 0
      %v2710 = vsel %vm381, %v2662, 0
      %v2713 = vsel %vm381, %v2664, 0
      %v2716 = vsel %vm381, %v2666, 0
      %v2719 = vsel %vm381, %v2668, 0
      %v2722 = vsel %vm381, %v2670, 0
      %v2725 = vsel %vm381, %v2672, 0
      %v2728 = vand.u32 %v2634, %v439
      %2730 = vmatprep.subr.bf16.mxu0 0
      %2731 = vmatpush1.bf16.msra.mxu0 0
      %2732 = vmatprep.subr.bf16.mxu0 0
      %2733 = vmatpush1.bf16.msra.mxu0 0
      %2734 = vmatprep.subr.bf16.mxu0 0
      %2735 = vmatpush1.bf16.msra.mxu0 0
      %2736 = vmatprep.subr.bf16.mxu0 0
      %2737 = vmatpush1.bf16.msra.mxu0 0
      %2738 = vmatprep.subr.bf16.mxu0 0
      %2739 = vmatpush1.bf16.msra.mxu0 0
      %2740 = vmatprep.subr.bf16.mxu0 0
      %2741 = vmatpush1.bf16.msra.mxu0 0
      %2742 = vmatprep.subr.bf16.mxu0 0
      %2743 = vmatpush1.bf16.msra.mxu0 0
      %2744 = vmatprep.subr.bf16.mxu0 0
      %2745 = vmatpush1.bf16.msra.mxu0 %v2728
      %2746 = vmatprep.subr.bf16.mxu0 0
      %2747 = vmatpush2.bf16.msra.mxu0 0
      %2748 = vmatprep.subr.bf16.mxu0 0
      %2749 = vmatpush2.bf16.msra.mxu0 0
      %2750 = vmatprep.subr.bf16.mxu0 0
      %2751 = vmatpush2.bf16.msra.mxu0 0
      %2752 = vmatprep.subr.bf16.mxu0 0
      %2753 = vmatpush2.bf16.msra.mxu0 0
      %2754 = vmatprep.subr.bf16.mxu0 0
      %2755 = vmatpush2.bf16.msra.mxu0 0
      %2756 = vmatprep.subr.bf16.mxu0 0
      %2757 = vmatpush2.bf16.msra.mxu0 0
      %2758 = vmatprep.subr.bf16.mxu0 0
      %2759 = vmatpush2.bf16.msra.mxu0 0
      %2760 = vmatprep.subr.bf16.mxu0 0
      %2761 = vmatpush2.bf16.msra.mxu0 0
      %2762 = vmatprep.mubr.bf16.mxu0 0
      %2763 = vmatmul.mubr.bf16.gmra.mxu0 %v2674
      %v2764 = vpop.f32.mrf.mxu0
      %v2765 = vadd.f32 0.0, %v2764
      %v2766 = vpop.f32.mrf.mxu0
      %v2767 = vpop.f32.mrf.mxu0
      %v2768 = vadd.f32 0.0, %v2767
      %v2769 = vpop.f32.mrf.mxu0
      %2770 = vmatprep.mubr.bf16.mxu0 0
      %2771 = vmatmul.mubr.bf16.gmra.mxu0 %v2677
      %v2772 = vpop.f32.mrf.mxu0
      %v2773 = vadd.f32 0.0, %v2772
      %v2774 = vpop.f32.mrf.mxu0
      %v2775 = vpop.f32.mrf.mxu0
      %v2776 = vadd.f32 0.0, %v2775
      %v2777 = vpop.f32.mrf.mxu0
      %2778 = vmatprep.mubr.bf16.mxu0 0
      %2779 = vmatmul.mubr.bf16.gmra.mxu0 %v2680
      %v2780 = vpop.f32.mrf.mxu0
      %v2781 = vadd.f32 0.0, %v2780
      %v2782 = vpop.f32.mrf.mxu0
      %v2783 = vpop.f32.mrf.mxu0
      %v2784 = vadd.f32 0.0, %v2783
      %v2785 = vpop.f32.mrf.mxu0
      %2786 = vmatprep.mubr.bf16.mxu0 0
      %2787 = vmatmul.mubr.bf16.gmra.mxu0 %v2683
      %v2788 = vpop.f32.mrf.mxu0
      %v2789 = vadd.f32 0.0, %v2788
      %v2790 = vpop.f32.mrf.mxu0
      %v2791 = vpop.f32.mrf.mxu0
      %v2792 = vadd.f32 0.0, %v2791
      %v2793 = vpop.f32.mrf.mxu0
      %2794 = vmatprep.mubr.bf16.mxu0 0
      %2795 = vmatmul.mubr.bf16.gmra.mxu0 %v2686
      %v2796 = vpop.f32.mrf.mxu0
      %v2797 = vadd.f32 0.0, %v2796
      %v2798 = vpop.f32.mrf.mxu0
      %v2799 = vpop.f32.mrf.mxu0
      %v2800 = vadd.f32 0.0, %v2799
      %v2801 = vpop.f32.mrf.mxu0
      %2802 = vmatprep.mubr.bf16.mxu0 0
      %2803 = vmatmul.mubr.bf16.gmra.mxu0 %v2689
      %v2804 = vpop.f32.mrf.mxu0
      %v2805 = vadd.f32 0.0, %v2804
      %v2806 = vpop.f32.mrf.mxu0
      %v2807 = vpop.f32.mrf.mxu0
      %v2808 = vadd.f32 0.0, %v2807
      %v2809 = vpop.f32.mrf.mxu0
      %2810 = vmatprep.mubr.bf16.mxu0 0
      %2811 = vmatmul.mubr.bf16.gmra.mxu0 %v2692
      %v2812 = vpop.f32.mrf.mxu0
      %v2813 = vadd.f32 0.0, %v2812
      %v2814 = vpop.f32.mrf.mxu0
      %v2815 = vpop.f32.mrf.mxu0
      %v2816 = vadd.f32 0.0, %v2815
      %v2817 = vpop.f32.mrf.mxu0
      %2818 = vmatprep.mubr.bf16.mxu0 0
      %2819 = vmatmul.mubr.bf16.gmra.mxu0 %v2695
      %v2820 = vpop.f32.mrf.mxu0
      %v2821 = vadd.f32 0.0, %v2820
      %v2822 = vpop.f32.mrf.mxu0
      %v2823 = vpop.f32.mrf.mxu0
      %v2824 = vadd.f32 0.0, %v2823
      %v2825 = vpop.f32.mrf.mxu0
      %2826 = vmatprep.mubr.bf16.mxu0 0
      %2827 = vmatmul.mubr.bf16.gmra.mxu0 %v2698
      %v2828 = vpop.f32.mrf.mxu0
      %v2829 = vadd.f32 0.0, %v2828
      %v2830 = vpop.f32.mrf.mxu0
      %v2831 = vpop.f32.mrf.mxu0
      %v2832 = vadd.f32 0.0, %v2831
      %v2833 = vpop.f32.mrf.mxu0
      %2834 = vmatprep.mubr.bf16.mxu0 0
      %2835 = vmatmul.mubr.bf16.gmra.mxu0 %v2701
      %v2836 = vpop.f32.mrf.mxu0
      %v2837 = vadd.f32 0.0, %v2836
      %v2838 = vpop.f32.mrf.mxu0
      %v2839 = vpop.f32.mrf.mxu0
      %v2840 = vadd.f32 0.0, %v2839
      %v2841 = vpop.f32.mrf.mxu0
      %2842 = vmatprep.mubr.bf16.mxu0 0
      %2843 = vmatmul.mubr.bf16.gmra.mxu0 %v2704
      %v2844 = vpop.f32.mrf.mxu0
      %v2845 = vadd.f32 0.0, %v2844
      %v2846 = vpop.f32.mrf.mxu0
      %v2847 = vpop.f32.mrf.mxu0
      %v2848 = vadd.f32 0.0, %v2847
      %v2849 = vpop.f32.mrf.mxu0
      %2850 = vmatprep.mubr.bf16.mxu0 0
      %2851 = vmatmul.mubr.bf16.gmra.mxu0 %v2707
      %v2852 = vpop.f32.mrf.mxu0
      %v2853 = vadd.f32 0.0, %v2852
      %v2854 = vpop.f32.mrf.mxu0
      %v2855 = vpop.f32.mrf.mxu0
      %v2856 = vadd.f32 0.0, %v2855
      %v2857 = vpop.f32.mrf.mxu0
      %2858 = vmatprep.mubr.bf16.mxu0 0
      %2859 = vmatmul.mubr.bf16.gmra.mxu0 %v2710
      %v2860 = vpop.f32.mrf.mxu0
      %v2861 = vadd.f32 0.0, %v2860
      %v2862 = vpop.f32.mrf.mxu0
      %v2863 = vpop.f32.mrf.mxu0
      %v2864 = vadd.f32 0.0, %v2863
      %v2865 = vpop.f32.mrf.mxu0
      %2866 = vmatprep.mubr.bf16.mxu0 0
      %2867 = vmatmul.mubr.bf16.gmra.mxu0 %v2713
      %v2868 = vpop.f32.mrf.mxu0
      %v2869 = vadd.f32 0.0, %v2868
      %v2870 = vpop.f32.mrf.mxu0
      %v2871 = vpop.f32.mrf.mxu0
      %v2872 = vadd.f32 0.0, %v2871
      %v2873 = vpop.f32.mrf.mxu0
      %2874 = vmatprep.mubr.bf16.mxu0 0
      %2875 = vmatmul.mubr.bf16.gmra.mxu0 %v2716
      %v2876 = vpop.f32.mrf.mxu0
      %v2877 = vadd.f32 0.0, %v2876
      %v2878 = vpop.f32.mrf.mxu0
      %v2879 = vpop.f32.mrf.mxu0
      %v2880 = vadd.f32 0.0, %v2879
      %v2881 = vpop.f32.mrf.mxu0
      %2882 = vmatprep.mubr.bf16.mxu0 0
      %2883 = vmatmul.mubr.bf16.gmra.mxu0 %v2719
      %v2884 = vpop.f32.mrf.mxu0
      %v2885 = vadd.f32 0.0, %v2884
      %v2886 = vpop.f32.mrf.mxu0
      %v2887 = vpop.f32.mrf.mxu0
      %v2888 = vadd.f32 0.0, %v2887
      %v2889 = vpop.f32.mrf.mxu0
      %2890 = vmatprep.mubr.bf16.mxu0 0
      %2891 = vmatmul.mubr.bf16.gmra.mxu0 %v2722
      %v2892 = vpop.f32.mrf.mxu0
      %v2893 = vadd.f32 0.0, %v2892
      %v2894 = vpop.f32.mrf.mxu0
      %v2895 = vpop.f32.mrf.mxu0
      %v2896 = vadd.f32 0.0, %v2895
      %v2897 = vpop.f32.mrf.mxu0
      %2898 = vmatprep.mubr.bf16.mxu0 0
      %2899 = vmatmul.mubr.bf16.gmra.mxu0 %v2725
      %v2900 = vpop.f32.mrf.mxu0
      %v2901 = vadd.f32 0.0, %v2900
      %v2902 = vpop.f32.mrf.mxu0
      %v2903 = vpop.f32.mrf.mxu0
      %v2904 = vadd.f32 0.0, %v2903
      %v2905 = vpop.f32.mrf.mxu0
      %2906 = vdwg.mxu0
      %v2907 = vadd.f32 %v2597, %v2765
      %v2908 = vadd.f32 %v2598, %v2768
      %v2909 = vadd.f32 %v2599, %v2773
      %v2910 = vadd.f32 %v2600, %v2776
      %v2911 = vadd.f32 %v2601, %v2781
      %v2912 = vadd.f32 %v2602, %v2784
      %v2913 = vadd.f32 %v2603, %v2789
      %v2914 = vadd.f32 %v2604, %v2792
      %v2915 = vadd.f32 %v2605, %v2797
      %v2916 = vadd.f32 %v2606, %v2800
      %v2917 = vadd.f32 %v2607, %v2805
      %v2918 = vadd.f32 %v2608, %v2808
      %v2919 = vadd.f32 %v2609, %v2813
      %v2920 = vadd.f32 %v2610, %v2816
      %v2921 = vadd.f32 %v2611, %v2821
      %v2922 = vadd.f32 %v2612, %v2824
      %v2923 = vadd.f32 %v2613, %v2829
      %v2924 = vadd.f32 %v2614, %v2832
      %v2925 = vadd.f32 %v2615, %v2837
      %v2926 = vadd.f32 %v2616, %v2840
      %v2927 = vadd.f32 %v2617, %v2845
      %v2928 = vadd.f32 %v2618, %v2848
      %v2929 = vadd.f32 %v2619, %v2853
      %v2930 = vadd.f32 %v2620, %v2856
      %v2931 = vadd.f32 %v2621, %v2861
      %v2932 = vadd.f32 %v2622, %v2864
      %v2933 = vadd.f32 %v2623, %v2869
      %v2934 = vadd.f32 %v2624, %v2872
      %v2935 = vadd.f32 %v2625, %v2877
      %v2936 = vadd.f32 %v2626, %v2880
      %v2937 = vadd.f32 %v2627, %v2885
      %v2938 = vadd.f32 %v2628, %v2888
      %v2939 = vadd.f32 %v2629, %v2893
      %v2940 = vadd.f32 %v2630, %v2896
      %v2941 = vadd.f32 %v2631, %v2901
      %v2942 = vadd.f32 %v2632, %v2904
      %v2943 = vld [vmem:[%s2] sm:$0x1]
      %v2945 = vlaneseq
      %v2946 = vshrl.u32 %v2945, 7
      %v2947 = vsub.s32 0, %v2946
      %v2948 = vrot.slane %v2943, %v2947
      %v2950 = vadd.f32 %v2907, %v2948
      %v2951 = vadd.f32 %v2908, %v2948
      %v2952 = vadd.f32 %v2909, %v2948
      %v2953 = vadd.f32 %v2910, %v2948
      %v2954 = vadd.f32 %v2911, %v2948
      %v2955 = vadd.f32 %v2912, %v2948
      %v2956 = vadd.f32 %v2913, %v2948
      %v2957 = vadd.f32 %v2914, %v2948
      %v2958 = vadd.f32 %v2915, %v2948
      %v2959 = vadd.f32 %v2916, %v2948
      %v2960 = vadd.f32 %v2917, %v2948
      %v2961 = vadd.f32 %v2918, %v2948
      %v2962 = vadd.f32 %v2919, %v2948
      %v2963 = vadd.f32 %v2920, %v2948
      %v2964 = vadd.f32 %v2921, %v2948
      %v2965 = vadd.f32 %v2922, %v2948
      %v2966 = vadd.f32 %v2923, %v2948
      %v2967 = vadd.f32 %v2924, %v2948
      %v2968 = vadd.f32 %v2925, %v2948
      %v2969 = vadd.f32 %v2926, %v2948
      %v2970 = vadd.f32 %v2927, %v2948
      %v2971 = vadd.f32 %v2928, %v2948
      %v2972 = vadd.f32 %v2929, %v2948
      %v2973 = vadd.f32 %v2930, %v2948
      %v2974 = vadd.f32 %v2931, %v2948
      %v2975 = vadd.f32 %v2932, %v2948
      %v2976 = vadd.f32 %v2933, %v2948
      %v2977 = vadd.f32 %v2934, %v2948
      %v2978 = vadd.f32 %v2935, %v2948
      %v2979 = vadd.f32 %v2936, %v2948
      %v2980 = vadd.f32 %v2937, %v2948
      %v2981 = vadd.f32 %v2938, %v2948
      %v2982 = vadd.f32 %v2939, %v2948
      %v2983 = vadd.f32 %v2940, %v2948
      %v2984 = vadd.f32 %v2941, %v2948
      %v2985 = vadd.f32 %v2942, %v2948
      %v2986 = vmax.f32 %v2950, 0.0
      %v2987 = vmax.f32 %v2951, 0.0
      %v2988 = vmax.f32 %v2952, 0.0
      %v2989 = vmax.f32 %v2953, 0.0
      %v2990 = vmax.f32 %v2954, 0.0
      %v2991 = vmax.f32 %v2955, 0.0
      %v2992 = vmax.f32 %v2956, 0.0
      %v2993 = vmax.f32 %v2957, 0.0
      %v2994 = vmax.f32 %v2958, 0.0
      %v2995 = vmax.f32 %v2959, 0.0
      %v2996 = vmax.f32 %v2960, 0.0
      %v2997 = vmax.f32 %v2961, 0.0
      %v2998 = vmax.f32 %v2962, 0.0
      %v2999 = vmax.f32 %v2963, 0.0
      %v3000 = vmax.f32 %v2964, 0.0
      %v3001 = vmax.f32 %v2965, 0.0
      %v3002 = vmax.f32 %v2966, 0.0
      %v3003 = vmax.f32 %v2967, 0.0
      %v3004 = vmax.f32 %v2968, 0.0
      %v3005 = vmax.f32 %v2969, 0.0
      %v3006 = vmax.f32 %v2970, 0.0
      %v3007 = vmax.f32 %v2971, 0.0
      %v3008 = vmax.f32 %v2972, 0.0
      %v3009 = vmax.f32 %v2973, 0.0
      %v3010 = vmax.f32 %v2974, 0.0
      %v3011 = vmax.f32 %v2975, 0.0
      %v3012 = vmax.f32 %v2976, 0.0
      %v3013 = vmax.f32 %v2977, 0.0
      %v3014 = vmax.f32 %v2978, 0.0
      %v3015 = vmax.f32 %v2979, 0.0
      %v3016 = vmax.f32 %v2980, 0.0
      %v3017 = vmax.f32 %v2981, 0.0
      %v3018 = vmax.f32 %v2982, 0.0
      %v3019 = vmax.f32 %v2983, 0.0
      %v3020 = vmax.f32 %v2984, 0.0
      %v3021 = vmax.f32 %v2985, 0.0
      %vm3022 = vcmask 261120
      %3023 = vst.msk [vmem:[%s170] sm:$0xff] %vm3022, %v2986
      %3024 = vst.msk [vmem:[%s170 + $0x8] sm:$0xff] %vm3022, %v2987
      %3025 = vst.msk [vmem:[%s170 + $0x10] sm:$0xff] %vm3022, %v2988
      %3026 = vst.msk [vmem:[%s170 + $0x18] sm:$0xff] %vm3022, %v2989
      %3027 = vst.msk [vmem:[%s170 + $0x20] sm:$0xff] %vm3022, %v2990
      %3028 = vst.msk [vmem:[%s170 + $0x28] sm:$0xff] %vm3022, %v2991
      %3029 = vst.msk [vmem:[%s170 + $0x30] sm:$0xff] %vm3022, %v2992
      %3030 = vst.msk [vmem:[%s170 + $0x38] sm:$0xff] %vm3022, %v2993
      %3031 = vst.msk [vmem:[%s170 + $0x40] sm:$0xff] %vm3022, %v2994
      %3032 = vst.msk [vmem:[%s170 + $0x48] sm:$0xff] %vm3022, %v2995
      %3033 = vst.msk [vmem:[%s170 + $0x50] sm:$0xff] %vm3022, %v2996
      %3034 = vst.msk [vmem:[%s170 + $0x58] sm:$0xff] %vm3022, %v2997
      %3035 = vst.msk [vmem:[%s170 + $0x60] sm:$0xff] %vm3022, %v2998
      %3036 = vst.msk [vmem:[%s170 + $0x68] sm:$0xff] %vm3022, %v2999
      %3037 = vst.msk [vmem:[%s170 + $0x70] sm:$0xff] %vm3022, %v3000
      %3038 = vst.msk [vmem:[%s170 + $0x78] sm:$0xff] %vm3022, %v3001
      %3039 = vst.msk [vmem:[%s170 + $0x80] sm:$0xff] %vm3022, %v3002
      %3040 = vst.msk [vmem:[%s170 + $0x88] sm:$0xff] %vm3022, %v3003
      %3041 = vst.msk [vmem:[%s170 + $0x90] sm:$0xff] %vm3022, %v3004
      %3042 = vst.msk [vmem:[%s170 + $0x98] sm:$0xff] %vm3022, %v3005
      %3043 = vst.msk [vmem:[%s170 + $0xa0] sm:$0xff] %vm3022, %v3006
      %3044 = vst.msk [vmem:[%s170 + $0xa8] sm:$0xff] %vm3022, %v3007
      %3045 = vst.msk [vmem:[%s170 + $0xb0] sm:$0xff] %vm3022, %v3008
      %3046 = vst.msk [vmem:[%s170 + $0xb8] sm:$0xff] %vm3022, %v3009
      %3047 = vst.msk [vmem:[%s170 + $0xc0] sm:$0xff] %vm3022, %v3010
      %3048 = vst.msk [vmem:[%s170 + $0xc8] sm:$0xff] %vm3022, %v3011
      %3049 = vst.msk [vmem:[%s170 + $0xd0] sm:$0xff] %vm3022, %v3012
      %3050 = vst.msk [vmem:[%s170 + $0xd8] sm:$0xff] %vm3022, %v3013
      %3051 = vst.msk [vmem:[%s170 + $0xe0] sm:$0xff] %vm3022, %v3014
      %3052 = vst.msk [vmem:[%s170 + $0xe8] sm:$0xff] %vm3022, %v3015
      %3053 = vst.msk [vmem:[%s170 + $0xf0] sm:$0xff] %vm3022, %v3016
      %3054 = vst.msk [vmem:[%s170 + $0xf8] sm:$0xff] %vm3022, %v3017
      %3055 = vst.msk [vmem:[%s170 + $0x100] sm:$0xff] %vm3022, %v3018
      %3056 = vst.msk [vmem:[%s170 + $0x108] sm:$0xff] %vm3022, %v3019
      %3057 = vst.msk [vmem:[%s170 + $0x110] sm:$0xff] %vm3022, %v3020
      %vm3058 = vcmask 259072
      %3059 = vst.msk [vmem:[%s170 + $0x118] sm:$0x3f] %vm3058, %v3021
      %p3060 = scmp.lt.s32.totalorder %s14, 1
      %s3061 = scalar_select %p3060, %s14, 1
      %s3062 = smul.addr %s3061, 36
      %s3063 = smul.addr %s3062, 8
      %s3064 = scalar_lea.vmem %s3, %s3063
      // Predicated region
      $region33: #{tpu_custom_call.1} parent=31 // pred_check
        %p3065 = pneg %p100
      $region34: #{tpu_custom_call.1} parent=31 // pred_check_branch
        %3067 = sbr.rel (%p3065) target = $region36
      $region35: #{tpu_custom_call.1} parent=31 // pred_region
        _
      $region36: #{tpu_custom_call.1} parent=31 // pred_fallthru
        _
    $region32: #{tpu_custom_call.1} parent=5 // pred_fallthru
      _
    %p3068 = scmp.le.s32.totalorder 2, %s9
    // Predicated region
    $region37: #{tpu_custom_call.1} parent=5 // pred_check
      %p3069 = pneg %p3068
    $region38: #{tpu_custom_call.1} parent=5 // pred_check_branch
      %3071 = sbr.rel (%p3069) target = $region40
    $region39: #{tpu_custom_call.1} parent=5 // pred_region
      %s3072 = ssub.s32 %s9, 2
      // Predicated region
      $region41: #{tpu_custom_call.1} parent=39 // pred_check
        %p3073 = pneg %p106
      $region42: #{tpu_custom_call.1} parent=39 // pred_check_branch
        %3075 = sbr.rel (%p3073) target = $region44
      $region43: #{tpu_custom_call.1} parent=39 // pred_region
        %p3076 = scmp.lt.s32.totalorder %s15, 1
        %s3077 = scalar_select %p3076, %s15, 1
        %s3078 = smul.addr %s3077, 36
        %s3079 = smul.addr %s3078, 8
        %s3080 = scalar_lea.vmem %s3, %s3079
      $region44: #{tpu_custom_call.1} parent=39 // pred_fallthru
        _
    $region40: #{tpu_custom_call.1} parent=5 // pred_fallthru
      _
  $region6: #{tpu_custom_call.1} parent=0 // loop_footer
    %s13 = sadd.s32 1, %s9
  $region7: #{tpu_custom_call.1} parent=0 // loop_footer_branch
    %8 = sbr.rel target = $region3
  $region8: #{tpu_custom_call.1} parent=0 // loop_exit
    _

</llo_original>
